<compile_context>
chip_gen: v7x
topology: tpu7x:2x2x1
jax: 0.10.0
libtpu: 0.0.40
codegen_flags: <defaults>
</compile_context>

<pallas_src>
import functools

import jax
import jax.numpy as jnp
from jax.experimental import pallas as pl
from jax.experimental.pallas import tpu as pltpu


# ----------------------------------------------------------------------------
# Fused ElaIN kernel (one grid step == one batch element)
# ----------------------------------------------------------------------------
def _elain_kernel(x_ref, add_ref,
                  ws_ref, bs_ref,          # mlp_same  : (C, C_add), (C, 1)
                  wg_ref, bg_ref,          # mlp_gamma : (C, C),     (C, 1)
                  wb_ref, bb_ref,          # mlp_beta  : (C, C),     (C, 1)
                  wwi_ref, wwx_ref, bw_ref,  # mlp_weight split: (C,C),(C,C),(C,1)
                  out_ref, *, eps):
    x = x_ref[0]      # (C, L)     -- L on lanes
    add = add_ref[0]  # (C_add, L)

    f32 = jnp.float32
    # 1x1 convs == channel matmuls; L stays on the lane axis throughout.
    a = jnp.dot(ws_ref[...], add, preferred_element_type=f32) + bs_ref[...]
    a_gamma = jnp.dot(wg_ref[...], a, preferred_element_type=f32) + bg_ref[...]
    a_beta = jnp.dot(wb_ref[...], a, preferred_element_type=f32) + bb_ref[...]

    L = x.shape[-1]
    inv_L = 1.0 / L
    id_avg = jnp.sum(a, axis=1, keepdims=True) * inv_L   # (C, 1)
    x_mean = jnp.sum(x, axis=1, keepdims=True) * inv_L   # (C, 1)  (== x_avg)

    # mlp_weight(cat(id_avg, x_avg)) computed as two matvecs (no in-kernel concat)
    weight = (jnp.dot(wwi_ref[...], id_avg, preferred_element_type=f32)
              + jnp.dot(wwx_ref[...], x_mean, preferred_element_type=f32)
              + bw_ref[...])                              # (C, 1)

    xc = x - x_mean
    # torch.var(dim=2) is unbiased -> divide by (L - 1)
    x_var = jnp.sum(xc * xc, axis=1, keepdims=True) * (1.0 / (L - 1)) + eps
    x_std = jnp.sqrt(x_var)

    one_minus_w = 1.0 - weight
    gamma = a_gamma * weight + x_std * one_minus_w
    beta = a_beta * weight + x_mean * one_minus_w

    out_ref[0] = (xc / x_std) * (1.0 + gamma) + beta


def elain_forward(params, x, addition, *, eps=1e-5):
    """x: (B, norm_nc, L) f32, addition: (B, addition_nc, L) f32 -> (B, norm_nc, L)."""
    B, C, L = x.shape
    Ba, Ca, La = addition.shape
    assert Ba == B and La == L and L >= 2

    x = x.astype(jnp.float32)
    addition = addition.astype(jnp.float32)

    # Split mlp_weight (C, 2C) into the half acting on id_avg and on x_avg.
    w_w_id = params["w_weight"][:, :C]
    w_w_x = params["w_weight"][:, C:]

    full = lambda a: pl.BlockSpec(a.shape, lambda b: (0,) * a.ndim)

    return pl.pallas_call(
        functools.partial(_elain_kernel, eps=eps),
        out_shape=jax.ShapeDtypeStruct((B, C, L), jnp.float32),
        grid=(B,),
        in_specs=[
            pl.BlockSpec((1, C, L), lambda b: (b, 0, 0)),
            pl.BlockSpec((1, Ca, L), lambda b: (b, 0, 0)),
            full(params["w_same"]), full(params["b_same"]),
            full(params["w_gamma"]), full(params["b_gamma"]),
            full(params["w_beta"]), full(params["b_beta"]),
            full(w_w_id), full(w_w_x), full(params["b_weight"]),
        ],
        out_specs=pl.BlockSpec((1, C, L), lambda b: (b, 0, 0)),
        compiler_params=pltpu.CompilerParams(
            dimension_semantics=("parallel",)),
    )(x, addition,
      params["w_same"], params["b_same"],
      params["w_gamma"], params["b_gamma"],
      params["w_beta"], params["b_beta"],
      w_w_id, w_w_x, params["b_weight"])


# ----------------------------------------------------------------------------
# Pure-JAX reference (mirrors the PyTorch forward exactly) for verification
# ----------------------------------------------------------------------------
def elain_reference(params, x, addition, eps=1e-5):
    def conv1x1(w, b, v):  # w (Cout, Cin), b (Cout, 1), v (B, Cin, L)
        return jnp.einsum("oi,bil->bol", w, v) + b[None]

    a = conv1x1(params["w_same"], params["b_same"], addition)
    a_gamma = conv1x1(params["w_gamma"], params["b_gamma"], a)
    a_beta = conv1x1(params["w_beta"], params["b_beta"], a)
    id_avg = jnp.mean(a, axis=2, keepdims=True)
    x_avg = jnp.mean(x, axis=2, keepdims=True)
    wcat = jnp.concatenate([id_avg, x_avg], axis=1)
    weight = conv1x1(params["w_weight"], params["b_weight"], wcat)
    x_mean = jnp.mean(x, axis=2, keepdims=True)
    x_std = jnp.sqrt(jnp.var(x, axis=2, ddof=1, keepdims=True) + eps)
    gamma = a_gamma * weight + x_std * (1.0 - weight)
    beta = a_beta * weight + x_mean * (1.0 - weight)
    return (x - x_mean) / x_std * (1.0 + gamma) + beta


# ----------------------------------------------------------------------------
# Deterministic synthetic parameters (PyTorch Conv1d-style init, (out, in) layout)
# ----------------------------------------------------------------------------
def init_params(key, norm_nc, addition_nc):
    def conv(k, fan_in, fan_out):
        kw, kb = jax.random.split(k)
        s = 1.0 / jnp.sqrt(fan_in)
        w = jax.random.uniform(kw, (fan_out, fan_in), jnp.float32, -s, s)
        b = jax.random.uniform(kb, (fan_out, 1), jnp.float32, -s, s)
        return w, b

    ks = jax.random.split(key, 4)
    p = {}
    p["w_same"], p["b_same"] = conv(ks[0], addition_nc, norm_nc)
    p["w_gamma"], p["b_gamma"] = conv(ks[1], norm_nc, norm_nc)
    p["w_beta"], p["b_beta"] = conv(ks[2], norm_nc, norm_nc)
    p["w_weight"], p["b_weight"] = conv(ks[3], 2 * norm_nc, norm_nc)
    return p


if __name__ == "__main__":
    B, NORM_NC, ADD_NC, L = 2, 64, 32, 128

    key = jax.random.PRNGKey(0)
    k_p, k_x, k_a = jax.random.split(key, 3)

    params = init_params(k_p, NORM_NC, ADD_NC)
    x = jax.random.normal(k_x, (B, NORM_NC, L), jnp.float32)
    addition = jax.random.normal(k_a, (B, ADD_NC, L), jnp.float32)

    out = jax.jit(elain_forward)(params, x, addition)
    jax.block_until_ready(out)
    assert out.shape == (B, NORM_NC, L)

    ref = elain_reference(params, x, addition)
    max_err = float(jnp.max(jnp.abs(out - ref)))
    assert max_err < 1e-3, f"max abs err vs reference: {max_err}"

    print("KERNEL_OK")
</pallas_src>

<mosaic_0001>
module attributes {stable_mosaic.version = 11 : i64} {
  func.func @_elain_kernel(%arg0: i32, %arg1: memref<1x64x128xf32, #tpu.memory_space<vmem>>, %arg2: memref<1x32x128xf32, #tpu.memory_space<vmem>>, %arg3: memref<64x32xf32, #tpu.memory_space<vmem>>, %arg4: memref<64x1xf32, #tpu.memory_space<vmem>>, %arg5: memref<64x64xf32, #tpu.memory_space<vmem>>, %arg6: memref<64x1xf32, #tpu.memory_space<vmem>>, %arg7: memref<64x64xf32, #tpu.memory_space<vmem>>, %arg8: memref<64x1xf32, #tpu.memory_space<vmem>>, %arg9: memref<64x64xf32, #tpu.memory_space<vmem>>, %arg10: memref<64x64xf32, #tpu.memory_space<vmem>>, %arg11: memref<64x1xf32, #tpu.memory_space<vmem>>, %arg12: memref<1x64x128xf32, #tpu.memory_space<vmem>>) attributes {dimension_semantics = [#tpu.dimension_semantics<parallel>], iteration_bounds = array<i64: 2>, scalar_prefetch = 0 : i64, scratch_operands = 0 : i64, tpu.core_type = #tpu.core_type<tc>, window_params = [{transform_indices = @transform_0, window_bounds = array<i64: 1, 64, 128>}, {transform_indices = @transform_1, window_bounds = array<i64: 1, 32, 128>}, {pipeline_mode = #tpu.pipeline_mode<synchronous>, transform_indices = @transform_2, window_bounds = array<i64: 64, 32>}, {pipeline_mode = #tpu.pipeline_mode<synchronous>, transform_indices = @transform_3, window_bounds = array<i64: 64, 1>}, {pipeline_mode = #tpu.pipeline_mode<synchronous>, transform_indices = @transform_4, window_bounds = array<i64: 64, 64>}, {pipeline_mode = #tpu.pipeline_mode<synchronous>, transform_indices = @transform_5, window_bounds = array<i64: 64, 1>}, {pipeline_mode = #tpu.pipeline_mode<synchronous>, transform_indices = @transform_6, window_bounds = array<i64: 64, 64>}, {pipeline_mode = #tpu.pipeline_mode<synchronous>, transform_indices = @transform_7, window_bounds = array<i64: 64, 1>}, {pipeline_mode = #tpu.pipeline_mode<synchronous>, transform_indices = @transform_8, window_bounds = array<i64: 64, 64>}, {pipeline_mode = #tpu.pipeline_mode<synchronous>, transform_indices = @transform_9, window_bounds = array<i64: 64, 64>}, {pipeline_mode = #tpu.pipeline_mode<synchronous>, transform_indices = @transform_10, window_bounds = array<i64: 64, 1>}, {transform_indices = @transform_11, window_bounds = array<i64: 1, 64, 128>}]} {
    %c0 = arith.constant 0 : index
    %c0_0 = arith.constant 0 : index
    %c0_1 = arith.constant 0 : index
    %0 = vector.load %arg1[%c0, %c0_0, %c0_1] : memref<1x64x128xf32, #tpu.memory_space<vmem>>, vector<1x64x128xf32>
    %1 = vector.shape_cast %0 : vector<1x64x128xf32> to vector<64x128xf32>
    %c0_2 = arith.constant 0 : index
    %c0_3 = arith.constant 0 : index
    %c0_4 = arith.constant 0 : index
    %2 = vector.load %arg2[%c0_2, %c0_3, %c0_4] : memref<1x32x128xf32, #tpu.memory_space<vmem>>, vector<1x32x128xf32>
    %3 = vector.shape_cast %2 : vector<1x32x128xf32> to vector<32x128xf32>
    %c0_5 = arith.constant 0 : index
    %c0_6 = arith.constant 0 : index
    %4 = vector.load %arg3[%c0_5, %c0_6] : memref<64x32xf32, #tpu.memory_space<vmem>>, vector<64x32xf32>
    %cst = arith.constant dense<0.000000e+00> : vector<64x128xf32>
    %5 = tpu.matmul %4, %3, %cst {dimension_numbers = #tpu.dot_dimension_numbers<[1], [0], [0], [1], [0, 0, 1, 1], [], []>} : vector<64x32xf32>, vector<32x128xf32>, vector<64x128xf32> -> vector<64x128xf32>
    %c0_7 = arith.constant 0 : index
    %c0_8 = arith.constant 0 : index
    %6 = vector.load %arg4[%c0_7, %c0_8] : memref<64x1xf32, #tpu.memory_space<vmem>>, vector<64x1xf32>
    %7 = vector.broadcast %6 : vector<64x1xf32> to vector<64x128xf32>
    %8 = arith.addf %5, %7 : vector<64x128xf32>
    %c0_9 = arith.constant 0 : index
    %c0_10 = arith.constant 0 : index
    %9 = vector.load %arg5[%c0_9, %c0_10] : memref<64x64xf32, #tpu.memory_space<vmem>>, vector<64x64xf32>
    %cst_11 = arith.constant dense<0.000000e+00> : vector<64x128xf32>
    %10 = tpu.matmul %9, %8, %cst_11 {dimension_numbers = #tpu.dot_dimension_numbers<[1], [0], [0], [1], [0, 0, 1, 1], [], []>} : vector<64x64xf32>, vector<64x128xf32>, vector<64x128xf32> -> vector<64x128xf32>
    %c0_12 = arith.constant 0 : index
    %c0_13 = arith.constant 0 : index
    %11 = vector.load %arg6[%c0_12, %c0_13] : memref<64x1xf32, #tpu.memory_space<vmem>>, vector<64x1xf32>
    %12 = vector.broadcast %11 : vector<64x1xf32> to vector<64x128xf32>
    %13 = arith.addf %10, %12 : vector<64x128xf32>
    %c0_14 = arith.constant 0 : index
    %c0_15 = arith.constant 0 : index
    %14 = vector.load %arg7[%c0_14, %c0_15] : memref<64x64xf32, #tpu.memory_space<vmem>>, vector<64x64xf32>
    %cst_16 = arith.constant dense<0.000000e+00> : vector<64x128xf32>
    %15 = tpu.matmul %14, %8, %cst_16 {dimension_numbers = #tpu.dot_dimension_numbers<[1], [0], [0], [1], [0, 0, 1, 1], [], []>} : vector<64x64xf32>, vector<64x128xf32>, vector<64x128xf32> -> vector<64x128xf32>
    %c0_17 = arith.constant 0 : index
    %c0_18 = arith.constant 0 : index
    %16 = vector.load %arg8[%c0_17, %c0_18] : memref<64x1xf32, #tpu.memory_space<vmem>>, vector<64x1xf32>
    %17 = vector.broadcast %16 : vector<64x1xf32> to vector<64x128xf32>
    %18 = arith.addf %15, %17 : vector<64x128xf32>
    %cst_19 = arith.constant dense<0.000000e+00> : vector<64xf32>
    %19 = vector.multi_reduction <add>, %8, %cst_19 [1] : vector<64x128xf32> to vector<64xf32>
    %20 = vector.shape_cast %19 : vector<64xf32> to vector<64x1xf32>
    %cst_20 = arith.constant 7.812500e-03 : f32
    %21 = vector.broadcast %cst_20 : f32 to vector<64x1xf32>
    %22 = arith.mulf %20, %21 : vector<64x1xf32>
    %cst_21 = arith.constant dense<0.000000e+00> : vector<64xf32>
    %23 = vector.multi_reduction <add>, %1, %cst_21 [1] : vector<64x128xf32> to vector<64xf32>
    %24 = vector.shape_cast %23 : vector<64xf32> to vector<64x1xf32>
    %cst_22 = arith.constant 7.812500e-03 : f32
    %25 = vector.broadcast %cst_22 : f32 to vector<64x1xf32>
    %26 = arith.mulf %24, %25 : vector<64x1xf32>
    %c0_23 = arith.constant 0 : index
    %c0_24 = arith.constant 0 : index
    %27 = vector.load %arg9[%c0_23, %c0_24] : memref<64x64xf32, #tpu.memory_space<vmem>>, vector<64x64xf32>
    %cst_25 = arith.constant dense<0.000000e+00> : vector<64x1xf32>
    %28 = tpu.matmul %27, %22, %cst_25 {dimension_numbers = #tpu.dot_dimension_numbers<[1], [0], [0], [1], [0, 0, 1, 1], [], []>} : vector<64x64xf32>, vector<64x1xf32>, vector<64x1xf32> -> vector<64x1xf32>
    %c0_26 = arith.constant 0 : index
    %c0_27 = arith.constant 0 : index
    %29 = vector.load %arg10[%c0_26, %c0_27] : memref<64x64xf32, #tpu.memory_space<vmem>>, vector<64x64xf32>
    %cst_28 = arith.constant dense<0.000000e+00> : vector<64x1xf32>
    %30 = tpu.matmul %29, %26, %cst_28 {dimension_numbers = #tpu.dot_dimension_numbers<[1], [0], [0], [1], [0, 0, 1, 1], [], []>} : vector<64x64xf32>, vector<64x1xf32>, vector<64x1xf32> -> vector<64x1xf32>
    %31 = arith.addf %28, %30 : vector<64x1xf32>
    %c0_29 = arith.constant 0 : index
    %c0_30 = arith.constant 0 : index
    %32 = vector.load %arg11[%c0_29, %c0_30] : memref<64x1xf32, #tpu.memory_space<vmem>>, vector<64x1xf32>
    %33 = arith.addf %31, %32 : vector<64x1xf32>
    %34 = vector.broadcast %26 : vector<64x1xf32> to vector<64x128xf32>
    %35 = arith.subf %1, %34 : vector<64x128xf32>
    %36 = arith.mulf %35, %35 : vector<64x128xf32>
    %cst_31 = arith.constant dense<0.000000e+00> : vector<64xf32>
    %37 = vector.multi_reduction <add>, %36, %cst_31 [1] : vector<64x128xf32> to vector<64xf32>
    %38 = vector.shape_cast %37 : vector<64xf32> to vector<64x1xf32>
    %cst_32 = arith.constant 0.00787401571 : f32
    %39 = vector.broadcast %cst_32 : f32 to vector<64x1xf32>
    %40 = arith.mulf %38, %39 : vector<64x1xf32>
    %cst_33 = arith.constant 9.99999974E-6 : f32
    %41 = vector.broadcast %cst_33 : f32 to vector<64x1xf32>
    %42 = arith.addf %40, %41 : vector<64x1xf32>
    %43 = math.sqrt %42 : vector<64x1xf32>
    %cst_34 = arith.constant 1.000000e+00 : f32
    %44 = vector.broadcast %cst_34 : f32 to vector<64x1xf32>
    %45 = arith.subf %44, %33 : vector<64x1xf32>
    %46 = vector.broadcast %33 : vector<64x1xf32> to vector<64x128xf32>
    %47 = arith.mulf %13, %46 : vector<64x128xf32>
    %48 = arith.mulf %43, %45 : vector<64x1xf32>
    %49 = vector.broadcast %48 : vector<64x1xf32> to vector<64x128xf32>
    %50 = arith.addf %47, %49 : vector<64x128xf32>
    %51 = vector.broadcast %33 : vector<64x1xf32> to vector<64x128xf32>
    %52 = arith.mulf %18, %51 : vector<64x128xf32>
    %53 = arith.mulf %26, %45 : vector<64x1xf32>
    %54 = vector.broadcast %53 : vector<64x1xf32> to vector<64x128xf32>
    %55 = arith.addf %52, %54 : vector<64x128xf32>
    %56 = vector.broadcast %43 : vector<64x1xf32> to vector<64x128xf32>
    %57 = arith.divf %35, %56 : vector<64x128xf32>
    %cst_35 = arith.constant 1.000000e+00 : f32
    %58 = vector.broadcast %cst_35 : f32 to vector<64x128xf32>
    %59 = arith.addf %58, %50 : vector<64x128xf32>
    %60 = arith.mulf %57, %59 : vector<64x128xf32>
    %61 = arith.addf %60, %55 : vector<64x128xf32>
    %c0_36 = arith.constant 0 : index
    %c0_37 = arith.constant 0 : index
    %c0_38 = arith.constant 0 : index
    %62 = vector.load %arg12[%c0_36, %c0_37, %c0_38] : memref<1x64x128xf32, #tpu.memory_space<vmem>>, vector<1x64x128xf32>
    %63 = vector.shape_cast %62 : vector<1x64x128xf32> to vector<64x128xf32>
    %64 = vector.shape_cast %61 : vector<64x128xf32> to vector<1x64x128xf32>
    tpu.vector_store %arg12[%c0_36, %c0_37, %c0_38], %64 {strides = array<i32>} : memref<1x64x128xf32, #tpu.memory_space<vmem>>, vector<1x64x128xf32>,
    return
  }
  func.func @transform_0(%arg0: i32) -> (i32, i32, i32) {
    %c0_i32 = arith.constant 0 : i32
    %c0_i32_0 = arith.constant 0 : i32
    %c0_i32_1 = arith.constant 0 : i32
    return %arg0, %c0_i32, %c0_i32_0 : i32, i32, i32
  }
  func.func @transform_1(%arg0: i32) -> (i32, i32, i32) {
    %c0_i32 = arith.constant 0 : i32
    %c0_i32_0 = arith.constant 0 : i32
    %c0_i32_1 = arith.constant 0 : i32
    return %arg0, %c0_i32, %c0_i32_0 : i32, i32, i32
  }
  func.func @transform_2(%arg0: i32) -> (i32, i32) {
    %c0_i32 = arith.constant 0 : i32
    %c0_i32_0 = arith.constant 0 : i32
    %c0_i32_1 = arith.constant 0 : i32
    return %c0_i32, %c0_i32_0 : i32, i32
  }
  func.func @transform_3(%arg0: i32) -> (i32, i32) {
    %c0_i32 = arith.constant 0 : i32
    %c0_i32_0 = arith.constant 0 : i32
    %c0_i32_1 = arith.constant 0 : i32
    return %c0_i32, %c0_i32_0 : i32, i32
  }
  func.func @transform_4(%arg0: i32) -> (i32, i32) {
    %c0_i32 = arith.constant 0 : i32
    %c0_i32_0 = arith.constant 0 : i32
    %c0_i32_1 = arith.constant 0 : i32
    return %c0_i32, %c0_i32_0 : i32, i32
  }
  func.func @transform_5(%arg0: i32) -> (i32, i32) {
    %c0_i32 = arith.constant 0 : i32
    %c0_i32_0 = arith.constant 0 : i32
    %c0_i32_1 = arith.constant 0 : i32
    return %c0_i32, %c0_i32_0 : i32, i32
  }
  func.func @transform_6(%arg0: i32) -> (i32, i32) {
    %c0_i32 = arith.constant 0 : i32
    %c0_i32_0 = arith.constant 0 : i32
    %c0_i32_1 = arith.constant 0 : i32
    return %c0_i32, %c0_i32_0 : i32, i32
  }
  func.func @transform_7(%arg0: i32) -> (i32, i32) {
    %c0_i32 = arith.constant 0 : i32
    %c0_i32_0 = arith.constant 0 : i32
    %c0_i32_1 = arith.constant 0 : i32
    return %c0_i32, %c0_i32_0 : i32, i32
  }
  func.func @transform_8(%arg0: i32) -> (i32, i32) {
    %c0_i32 = arith.constant 0 : i32
    %c0_i32_0 = arith.constant 0 : i32
    %c0_i32_1 = arith.constant 0 : i32
    return %c0_i32, %c0_i32_0 : i32, i32
  }
  func.func @transform_9(%arg0: i32) -> (i32, i32) {
    %c0_i32 = arith.constant 0 : i32
    %c0_i32_0 = arith.constant 0 : i32
    %c0_i32_1 = arith.constant 0 : i32
    return %c0_i32, %c0_i32_0 : i32, i32
  }
  func.func @transform_10(%arg0: i32) -> (i32, i32) {
    %c0_i32 = arith.constant 0 : i32
    %c0_i32_0 = arith.constant 0 : i32
    %c0_i32_1 = arith.constant 0 : i32
    return %c0_i32, %c0_i32_0 : i32, i32
  }
  func.func @transform_11(%arg0: i32) -> (i32, i32, i32) {
    %c0_i32 = arith.constant 0 : i32
    %c0_i32_0 = arith.constant 0 : i32
    %c0_i32_1 = arith.constant 0 : i32
    return %arg0, %c0_i32, %c0_i32_0 : i32, i32, i32
  }
}

</mosaic_0001>

<llo_original>
// kernel: elain_forward.1
$region0: #{elain_forward.1}
  #allocation0 [shape = 'u32[]', space=smem, size = 0x4, offset = 0x4, fixed_abs, tag = 'smem constant byte address 0x4 - core index']
  #allocation1 [shape = 'u32[144,128]{1,0:T(1,128)}', space=vmem, size = 0x12000, scoped, tag = 'internal scratch']
  %s0 = inlined_call_operand.vmem [shape: f32[2,64,128], index: 0, kind: input, shape index: {}]
  %s1 = inlined_call_operand.vmem [shape: f32[2,32,128], index: 1, kind: input, shape index: {}]
  %s2 = inlined_call_operand.vmem [shape: f32[64,32], index: 2, kind: input, shape index: {}]
  %s3 = inlined_call_operand.vmem [shape: f32[64,1], index: 3, kind: input, shape index: {}]
  %s4 = inlined_call_operand.vmem [shape: f32[64,64], index: 4, kind: input, shape index: {}]
  %s5 = inlined_call_operand.vmem [shape: f32[64,1], index: 5, kind: input, shape index: {}]
  %s6 = inlined_call_operand.vmem [shape: f32[64,64], index: 6, kind: input, shape index: {}]
  %s7 = inlined_call_operand.vmem [shape: f32[64,1], index: 7, kind: input, shape index: {}]
  %s8 = inlined_call_operand.vmem [shape: f32[64,64], index: 8, kind: input, shape index: {}]
  %s9 = inlined_call_operand.vmem [shape: f32[64,64], index: 9, kind: input, shape index: {}]
  %s10 = inlined_call_operand.vmem [shape: f32[64,1], index: 10, kind: input, shape index: {}]
  %s11 = inlined_call_operand.hbm [shape: f32[2,64,128], index: 11, kind: output, shape index: {}]
  %s12 = sld [smem:[#allocation0]]
  $region77: #{elain_forward.1} parent=0
    _
  %s14 = ssub.s32 1, %s12
  %s15 = scalar_select 0, %s14, %s12
  $region1: #{elain_forward.1} parent=0
    #allocation2 [shape = 'u8[65536]{0}', space=vmem, size = 0x10000, scoped, tag = 'output window, operand 0']
    #allocation3 [shape = 's32[2]{0}', space=sflag, size = 0x8, scoped, tag = 'scoped memory for elain_forward.1']
    %16 = vsyncpa [#allocation3], 0
    %s17 = scalar_lea.sflag [#allocation3], 1
    %18 = vsyncpa %s17, 0
    loop: start=0, step=1, limit=4
    $region2: #{elain_forward.1} parent=1 // loop_pre_header
      _
    $region3: #{elain_forward.1} parent=1 // loop_header
      %s20 = sphi 0, %s24
      %p21 = scmp.ge.s32.totalorder %s20, 4
      %s30 = sphi 0, %s32
      %s33 = sphi 0, %s30
      %s34 = sphi 0, %s33
      %s50 = sphi 0, %s34
      %s56 = sphi 0, %s58
      %s59 = sphi 0, %s56
      %s60 = sphi 0, %s59
      %s76 = sphi 0, %s60
      %s80 = sphi 0, %s80
      %s82 = sphi 0, %s80
      %s83 = sphi 0, %s82
      %s97 = sphi 0, %s83
      %s101 = sphi 0, %s101
      %s103 = sphi 0, %s101
      %s104 = sphi 0, %s103
      %s118 = sphi 0, %s104
      %s122 = sphi 0, %s122
      %s124 = sphi 0, %s122
      %s125 = sphi 0, %s124
      %s139 = sphi 0, %s125
      %s143 = sphi 0, %s143
      %s145 = sphi 0, %s143
      %s146 = sphi 0, %s145
      %s160 = sphi 0, %s146
      %s164 = sphi 0, %s164
      %s166 = sphi 0, %s164
      %s167 = sphi 0, %s166
      %s181 = sphi 0, %s167
      %s185 = sphi 0, %s185
      %s187 = sphi 0, %s185
      %s188 = sphi 0, %s187
      %s202 = sphi 0, %s188
      %s206 = sphi 0, %s206
      %s208 = sphi 0, %s206
      %s209 = sphi 0, %s208
      %s223 = sphi 0, %s209
      %s227 = sphi 0, %s227
      %s229 = sphi 0, %s227
      %s230 = sphi 0, %s229
      %s244 = sphi 0, %s230
      %s248 = sphi 0, %s248
      %s250 = sphi 0, %s248
      %s251 = sphi 0, %s250
      %s265 = sphi 0, %s251
      %s271 = sphi 0, %s273
      %s274 = sphi 0, %s271
      %s275 = sphi 0, %s274
      %s291 = sphi 0, %s275
    $region4: #{elain_forward.1} parent=1 // loop_header_branch
      %23 = sbr.rel (%p21) target = $region8
    $region5: #{elain_forward.1} parent=1 // loop_body
      %s25 = ssub.s32 %s20, 1
      %s26 = ssub.s32 %s20, 2
      %s27 = sadd.s32 %s20, 1
      %s28 = ssub.s32 %s20, %s27
      %p29 = scmp.eq.s32.totalorder %s28, 0
      %s31 = sadd.s32 %s30, 1
      %s32 = scalar_select %p29, %s30, %s31
      %p35 = pneg %p29
      %p36 = scmp.eq.s32.totalorder %s20, 1
      %p37 = por %p35, %p36
      %p38 = scmp.ne.s32.totalorder %s30, %s33
      %p39 = scmp.eq.s32.totalorder %s20, 0
      %p40 = por %p38, %p39
      %p41 = scmp.ne.s32.totalorder %s30, %s33
      %p42 = scmp.eq.s32.totalorder %s25, 1
      %p43 = por %p41, %p42
      %p44 = scmp.ne.s32.totalorder %s33, %s34
      %p45 = scmp.eq.s32.totalorder %s25, 0
      %p46 = por %p44, %p45
      %p47 = scmp.ne.s32.totalorder %s33, %s34
      %p48 = scmp.eq.s32.totalorder %s26, 1
      %p49 = por %p47, %p48
      %p51 = scmp.ne.s32.totalorder %s34, %s50
      %p52 = scmp.eq.s32.totalorder %s26, 0
      %p53 = por %p51, %p52
      %s54 = ssub.s32 %s20, %s27
      %p55 = scmp.eq.s32.totalorder %s54, 0
      %s57 = sadd.s32 %s56, 1
      %s58 = scalar_select %p55, %s56, %s57
      %p61 = pneg %p55
      %p62 = scmp.eq.s32.totalorder %s20, 1
      %p63 = por %p61, %p62
      %p64 = scmp.ne.s32.totalorder %s56, %s59
      %p65 = scmp.eq.s32.totalorder %s20, 0
      %p66 = por %p64, %p65
      %p67 = scmp.ne.s32.totalorder %s56, %s59
      %p68 = scmp.eq.s32.totalorder %s25, 1
      %p69 = por %p67, %p68
      %p70 = scmp.ne.s32.totalorder %s59, %s60
      %p71 = scmp.eq.s32.totalorder %s25, 0
      %p72 = por %p70, %p71
      %p73 = scmp.ne.s32.totalorder %s59, %s60
      %p74 = scmp.eq.s32.totalorder %s26, 1
      %p75 = por %p73, %p74
      %p77 = scmp.ne.s32.totalorder %s60, %s76
      %p78 = scmp.eq.s32.totalorder %s26, 0
      %p79 = por %p77, %p78
      %s81 = sadd.s32 %s80, 1
      %p84 = scmp.eq.s32.totalorder %s20, 1
      %p85 = scmp.ne.s32.totalorder %s80, %s82
      %p86 = scmp.eq.s32.totalorder %s20, 0
      %p87 = por %p85, %p86
      %p88 = scmp.ne.s32.totalorder %s80, %s82
      %p89 = scmp.eq.s32.totalorder %s25, 1
      %p90 = por %p88, %p89
      %p91 = scmp.ne.s32.totalorder %s82, %s83
      %p92 = scmp.eq.s32.totalorder %s25, 0
      %p93 = por %p91, %p92
      %p94 = scmp.ne.s32.totalorder %s82, %s83
      %p95 = scmp.eq.s32.totalorder %s26, 1
      %p96 = por %p94, %p95
      %p98 = scmp.ne.s32.totalorder %s83, %s97
      %p99 = scmp.eq.s32.totalorder %s26, 0
      %p100 = por %p98, %p99
      %s102 = sadd.s32 %s101, 1
      %p105 = scmp.eq.s32.totalorder %s20, 1
      %p106 = scmp.ne.s32.totalorder %s101, %s103
      %p107 = scmp.eq.s32.totalorder %s20, 0
      %p108 = por %p106, %p107
      %p109 = scmp.ne.s32.totalorder %s101, %s103
      %p110 = scmp.eq.s32.totalorder %s25, 1
      %p111 = por %p109, %p110
      %p112 = scmp.ne.s32.totalorder %s103, %s104
      %p113 = scmp.eq.s32.totalorder %s25, 0
      %p114 = por %p112, %p113
      %p115 = scmp.ne.s32.totalorder %s103, %s104
      %p116 = scmp.eq.s32.totalorder %s26, 1
      %p117 = por %p115, %p116
      %p119 = scmp.ne.s32.totalorder %s104, %s118
      %p120 = scmp.eq.s32.totalorder %s26, 0
      %p121 = por %p119, %p120
      %s123 = sadd.s32 %s122, 1
      %p126 = scmp.eq.s32.totalorder %s20, 1
      %p127 = scmp.ne.s32.totalorder %s122, %s124
      %p128 = scmp.eq.s32.totalorder %s20, 0
      %p129 = por %p127, %p128
      %p130 = scmp.ne.s32.totalorder %s122, %s124
      %p131 = scmp.eq.s32.totalorder %s25, 1
      %p132 = por %p130, %p131
      %p133 = scmp.ne.s32.totalorder %s124, %s125
      %p134 = scmp.eq.s32.totalorder %s25, 0
      %p135 = por %p133, %p134
      %p136 = scmp.ne.s32.totalorder %s124, %s125
      %p137 = scmp.eq.s32.totalorder %s26, 1
      %p138 = por %p136, %p137
      %p140 = scmp.ne.s32.totalorder %s125, %s139
      %p141 = scmp.eq.s32.totalorder %s26, 0
      %p142 = por %p140, %p141
      %s144 = sadd.s32 %s143, 1
      %p147 = scmp.eq.s32.totalorder %s20, 1
      %p148 = scmp.ne.s32.totalorder %s143, %s145
      %p149 = scmp.eq.s32.totalorder %s20, 0
      %p150 = por %p148, %p149
      %p151 = scmp.ne.s32.totalorder %s143, %s145
      %p152 = scmp.eq.s32.totalorder %s25, 1
      %p153 = por %p151, %p152
      %p154 = scmp.ne.s32.totalorder %s145, %s146
      %p155 = scmp.eq.s32.totalorder %s25, 0
      %p156 = por %p154, %p155
      %p157 = scmp.ne.s32.totalorder %s145, %s146
      %p158 = scmp.eq.s32.totalorder %s26, 1
      %p159 = por %p157, %p158
      %p161 = scmp.ne.s32.totalorder %s146, %s160
      %p162 = scmp.eq.s32.totalorder %s26, 0
      %p163 = por %p161, %p162
      %s165 = sadd.s32 %s164, 1
      %p168 = scmp.eq.s32.totalorder %s20, 1
      %p169 = scmp.ne.s32.totalorder %s164, %s166
      %p170 = scmp.eq.s32.totalorder %s20, 0
      %p171 = por %p169, %p170
      %p172 = scmp.ne.s32.totalorder %s164, %s166
      %p173 = scmp.eq.s32.totalorder %s25, 1
      %p174 = por %p172, %p173
      %p175 = scmp.ne.s32.totalorder %s166, %s167
      %p176 = scmp.eq.s32.totalorder %s25, 0
      %p177 = por %p175, %p176
      %p178 = scmp.ne.s32.totalorder %s166, %s167
      %p179 = scmp.eq.s32.totalorder %s26, 1
      %p180 = por %p178, %p179
      %p182 = scmp.ne.s32.totalorder %s167, %s181
      %p183 = scmp.eq.s32.totalorder %s26, 0
      %p184 = por %p182, %p183
      %s186 = sadd.s32 %s185, 1
      %p189 = scmp.eq.s32.totalorder %s20, 1
      %p190 = scmp.ne.s32.totalorder %s185, %s187
      %p191 = scmp.eq.s32.totalorder %s20, 0
      %p192 = por %p190, %p191
      %p193 = scmp.ne.s32.totalorder %s185, %s187
      %p194 = scmp.eq.s32.totalorder %s25, 1
      %p195 = por %p193, %p194
      %p196 = scmp.ne.s32.totalorder %s187, %s188
      %p197 = scmp.eq.s32.totalorder %s25, 0
      %p198 = por %p196, %p197
      %p199 = scmp.ne.s32.totalorder %s187, %s188
      %p200 = scmp.eq.s32.totalorder %s26, 1
      %p201 = por %p199, %p200
      %p203 = scmp.ne.s32.totalorder %s188, %s202
      %p204 = scmp.eq.s32.totalorder %s26, 0
      %p205 = por %p203, %p204
      %s207 = sadd.s32 %s206, 1
      %p210 = scmp.eq.s32.totalorder %s20, 1
      %p211 = scmp.ne.s32.totalorder %s206, %s208
      %p212 = scmp.eq.s32.totalorder %s20, 0
      %p213 = por %p211, %p212
      %p214 = scmp.ne.s32.totalorder %s206, %s208
      %p215 = scmp.eq.s32.totalorder %s25, 1
      %p216 = por %p214, %p215
      %p217 = scmp.ne.s32.totalorder %s208, %s209
      %p218 = scmp.eq.s32.totalorder %s25, 0
      %p219 = por %p217, %p218
      %p220 = scmp.ne.s32.totalorder %s208, %s209
      %p221 = scmp.eq.s32.totalorder %s26, 1
      %p222 = por %p220, %p221
      %p224 = scmp.ne.s32.totalorder %s209, %s223
      %p225 = scmp.eq.s32.totalorder %s26, 0
      %p226 = por %p224, %p225
      %s228 = sadd.s32 %s227, 1
      %p231 = scmp.eq.s32.totalorder %s20, 1
      %p232 = scmp.ne.s32.totalorder %s227, %s229
      %p233 = scmp.eq.s32.totalorder %s20, 0
      %p234 = por %p232, %p233
      %p235 = scmp.ne.s32.totalorder %s227, %s229
      %p236 = scmp.eq.s32.totalorder %s25, 1
      %p237 = por %p235, %p236
      %p238 = scmp.ne.s32.totalorder %s229, %s230
      %p239 = scmp.eq.s32.totalorder %s25, 0
      %p240 = por %p238, %p239
      %p241 = scmp.ne.s32.totalorder %s229, %s230
      %p242 = scmp.eq.s32.totalorder %s26, 1
      %p243 = por %p241, %p242
      %p245 = scmp.ne.s32.totalorder %s230, %s244
      %p246 = scmp.eq.s32.totalorder %s26, 0
      %p247 = por %p245, %p246
      %s249 = sadd.s32 %s248, 1
      %p252 = scmp.eq.s32.totalorder %s20, 1
      %p253 = scmp.ne.s32.totalorder %s248, %s250
      %p254 = scmp.eq.s32.totalorder %s20, 0
      %p255 = por %p253, %p254
      %p256 = scmp.ne.s32.totalorder %s248, %s250
      %p257 = scmp.eq.s32.totalorder %s25, 1
      %p258 = por %p256, %p257
      %p259 = scmp.ne.s32.totalorder %s250, %s251
      %p260 = scmp.eq.s32.totalorder %s25, 0
      %p261 = por %p259, %p260
      %p262 = scmp.ne.s32.totalorder %s250, %s251
      %p263 = scmp.eq.s32.totalorder %s26, 1
      %p264 = por %p262, %p263
      %p266 = scmp.ne.s32.totalorder %s251, %s265
      %p267 = scmp.eq.s32.totalorder %s26, 0
      %p268 = por %p266, %p267
      %s269 = ssub.s32 %s20, %s27
      %p270 = scmp.eq.s32.totalorder %s269, 0
      %s272 = sadd.s32 %s271, 1
      %s273 = scalar_select %p270, %s271, %s272
      %p276 = pneg %p270
      %p277 = scmp.eq.s32.totalorder %s20, 1
      %p278 = por %p276, %p277
      %p279 = scmp.ne.s32.totalorder %s271, %s274
      %p280 = scmp.eq.s32.totalorder %s20, 0
      %p281 = por %p279, %p280
      %p282 = scmp.ne.s32.totalorder %s271, %s274
      %p283 = scmp.eq.s32.totalorder %s25, 1
      %p284 = por %p282, %p283
      %p285 = scmp.ne.s32.totalorder %s274, %s275
      %p286 = scmp.eq.s32.totalorder %s25, 0
      %p287 = por %p285, %p286
      %p288 = scmp.ne.s32.totalorder %s274, %s275
      %p289 = scmp.eq.s32.totalorder %s26, 1
      %p290 = por %p288, %p289
      %p292 = scmp.ne.s32.totalorder %s275, %s291
      %p293 = scmp.eq.s32.totalorder %s26, 0
      %p294 = por %p292, %p293
      %p295 = scmp.le.s32.totalorder 1, %s20
      %p296 = scmp.lt.s32.totalorder %s20, 3
      %p297 = pnand %p295, %p296
      %p298 = pneg %p297
      // Predicated region
      $region9: #{elain_forward.1} parent=5 // pred_check
        _
      $region10: #{elain_forward.1} parent=5 // pred_check_branch
        %300 = sbr.rel (%p297) target = $region12
      $region11: #{elain_forward.1} parent=5 // pred_region
        %s301 = ssub.s32 %s20, 1
        // Predicated region
        $region13: #{elain_forward.1} parent=11 // pred_check
          %p302 = pneg %p93
        $region14: #{elain_forward.1} parent=11 // pred_check_branch
          %304 = sbr.rel (%p302) target = $region16
        $region15: #{elain_forward.1} parent=11 // pred_region
          _
        $region16: #{elain_forward.1} parent=11 // pred_fallthru
          _
        // Predicated region
        $region17: #{elain_forward.1} parent=11 // pred_check
          %p305 = pneg %p114
        $region18: #{elain_forward.1} parent=11 // pred_check_branch
          %307 = sbr.rel (%p305) target = $region20
        $region19: #{elain_forward.1} parent=11 // pred_region
          _
        $region20: #{elain_forward.1} parent=11 // pred_fallthru
          _
        // Predicated region
        $region21: #{elain_forward.1} parent=11 // pred_check
          %p308 = pneg %p135
        $region22: #{elain_forward.1} parent=11 // pred_check_branch
          %310 = sbr.rel (%p308) target = $region24
        $region23: #{elain_forward.1} parent=11 // pred_region
          _
        $region24: #{elain_forward.1} parent=11 // pred_fallthru
          _
        // Predicated region
        $region25: #{elain_forward.1} parent=11 // pred_check
          %p311 = pneg %p156
        $region26: #{elain_forward.1} parent=11 // pred_check_branch
          %313 = sbr.rel (%p311) target = $region28
        $region27: #{elain_forward.1} parent=11 // pred_region
          _
        $region28: #{elain_forward.1} parent=11 // pred_fallthru
          _
        // Predicated region
        $region29: #{elain_forward.1} parent=11 // pred_check
          %p314 = pneg %p177
        $region30: #{elain_forward.1} parent=11 // pred_check_branch
          %316 = sbr.rel (%p314) target = $region32
        $region31: #{elain_forward.1} parent=11 // pred_region
          _
        $region32: #{elain_forward.1} parent=11 // pred_fallthru
          _
        // Predicated region
        $region33: #{elain_forward.1} parent=11 // pred_check
          %p317 = pneg %p198
        $region34: #{elain_forward.1} parent=11 // pred_check_branch
          %319 = sbr.rel (%p317) target = $region36
        $region35: #{elain_forward.1} parent=11 // pred_region
          _
        $region36: #{elain_forward.1} parent=11 // pred_fallthru
          _
        // Predicated region
        $region37: #{elain_forward.1} parent=11 // pred_check
          %p320 = pneg %p219
        $region38: #{elain_forward.1} parent=11 // pred_check_branch
          %322 = sbr.rel (%p320) target = $region40
        $region39: #{elain_forward.1} parent=11 // pred_region
          _
        $region40: #{elain_forward.1} parent=11 // pred_fallthru
          _
        // Predicated region
        $region41: #{elain_forward.1} parent=11 // pred_check
          %p323 = pneg %p240
        $region42: #{elain_forward.1} parent=11 // pred_check_branch
          %325 = sbr.rel (%p323) target = $region44
        $region43: #{elain_forward.1} parent=11 // pred_region
          _
        $region44: #{elain_forward.1} parent=11 // pred_fallthru
          _
        // Predicated region
        $region45: #{elain_forward.1} parent=11 // pred_check
          %p326 = pneg %p261
        $region46: #{elain_forward.1} parent=11 // pred_check_branch
          %328 = sbr.rel (%p326) target = $region48
        $region47: #{elain_forward.1} parent=11 // pred_region
          _
        $region48: #{elain_forward.1} parent=11 // pred_fallthru
          _
      $region12: #{elain_forward.1} parent=5 // pred_fallthru
        _
      %p329 = scmp.lt.s32.totalorder %s20, 2
      // Predicated region
      $region49: #{elain_forward.1} parent=5 // pred_check
        %p330 = pneg %p329
      $region50: #{elain_forward.1} parent=5 // pred_check_branch
        %332 = sbr.rel (%p330) target = $region52
      $region51: #{elain_forward.1} parent=5 // pred_region
        // Predicated region
        $region53: #{elain_forward.1} parent=51 // pred_check
          %p333 = pneg %p40
        $region54: #{elain_forward.1} parent=51 // pred_check_branch
          %335 = sbr.rel (%p333) target = $region56
        $region55: #{elain_forward.1} parent=51 // pred_region
          %p336 = scmp.lt.s32.totalorder %s20, 1
          %s337 = scalar_select %p336, %s20, 1
          %s338 = smul.addr %s337, 8
          %s339 = smul.addr %s338, 8
          %s340 = scalar_lea.vmem %s0, %s339
        $region56: #{elain_forward.1} parent=51 // pred_fallthru
          _
        // Predicated region
        $region57: #{elain_forward.1} parent=51 // pred_check
          %p341 = pneg %p66
        $region58: #{elain_forward.1} parent=51 // pred_check_branch
          %343 = sbr.rel (%p341) target = $region60
        $region59: #{elain_forward.1} parent=51 // pred_region
          %p344 = scmp.lt.s32.totalorder %s20, 1
          %s345 = scalar_select %p344, %s20, 1
          %s346 = smul.addr %s345, 4
          %s347 = smul.addr %s346, 8
          %s348 = scalar_lea.vmem %s1, %s347
        $region60: #{elain_forward.1} parent=51 // pred_fallthru
          _
      $region52: #{elain_forward.1} parent=5 // pred_fallthru
        _
      %p349 = scmp.le.s32.totalorder 1, %s20
      %p350 = scmp.lt.s32.totalorder %s20, 3
      %p351 = pnand %p349, %p350
      %p352 = pneg %p351
      // Predicated region
      $region61: #{elain_forward.1} parent=5 // pred_check
        _
      $region62: #{elain_forward.1} parent=5 // pred_check_branch
        %354 = sbr.rel (%p351) target = $region64
      $region63: #{elain_forward.1} parent=5 // pred_region
        %s355 = ssub.s32 %s20, 1
        %p356 = scmp.lt.s32.totalorder %s25, 1
        %s357 = scalar_select %p356, %s25, 1
        %s358 = smul.addr %s357, 8
        %s359 = smul.addr %s358, 8
        %s360 = scalar_lea.vmem %s0, %s359
        %p361 = pneg %p46
        %p362 = pneg %p43
        %p363 = scmp.lt.s32.totalorder %s25, 1
        %s364 = scalar_select %p363, %s25, 1
        %s365 = smul.addr %s364, 4
        %s366 = smul.addr %s365, 8
        %s367 = scalar_lea.vmem %s1, %s366
        %p368 = pneg %p72
        %p369 = pneg %p69
        %p370 = pneg %p93
        %p371 = pneg %p90
        %p372 = pneg %p114
        %p373 = pneg %p111
        %p374 = pneg %p135
        %p375 = pneg %p132
        %p376 = pneg %p156
        %p377 = pneg %p153
        %p378 = pneg %p177
        %p379 = pneg %p174
        %p380 = pneg %p198
        %p381 = pneg %p195
        %p382 = pneg %p219
        %p383 = pneg %p216
        %p384 = pneg %p240
        %p385 = pneg %p237
        %p386 = pneg %p261
        %p387 = pneg %p258
        %p388 = pneg %p287
        %p389 = pneg %p284
        %s390 = sand.u32 %s274, 1
        %s391 = scalar_lea.sflag [#allocation3], %s390
        %s392 = sand.u32 %s274, 1
        %s393 = smul.addr %s392, 64
        %s394 = scalar_lea.vmem [#allocation2], %s393
        %p395 = scmp.lt.s32.totalorder %s25, 1
        %s396 = scalar_select %p395, %s25, 1
        %s397 = smul.addr %s396, 8
        %s398 = smul.addr %s397, 8
        %s399 = scalar_lea.vmem %s0, %s398
        %p400 = scmp.lt.s32.totalorder %s25, 1
        %s401 = scalar_select %p400, %s25, 1
        %s402 = smul.addr %s401, 4
        %s403 = smul.addr %s402, 8
        %s404 = scalar_lea.vmem %s1, %s403
        %v405 = vld [vmem:[%s399] sm:$0xff]
        %v406 = vld [vmem:[%s399 + $0x8] sm:$0xff]
        %v407 = vld [vmem:[%s399 + $0x10] sm:$0xff]
        %v408 = vld [vmem:[%s399 + $0x18] sm:$0xff]
        %v409 = vld [vmem:[%s399 + $0x20] sm:$0xff]
        %v410 = vld [vmem:[%s399 + $0x28] sm:$0xff]
        %v411 = vld [vmem:[%s399 + $0x30] sm:$0xff]
        %v412 = vld [vmem:[%s399 + $0x38] sm:$0xff]
        %v413 = vld [vmem:[%s404] sm:$0xff]
        %v414 = vld [vmem:[%s404 + $0x8] sm:$0xff]
        %v415 = vld [vmem:[%s404 + $0x10] sm:$0xff]
        %v416 = vld [vmem:[%s404 + $0x18] sm:$0xff]
        %v417 = vld [vmem:[%s2] sm:$0xff]
        %v418 = vld [vmem:[%s2 + $0x8] sm:$0xff]
        %v419 = vld [vmem:[%s2 + $0x10] sm:$0xff]
        %v420 = vld [vmem:[%s2 + $0x18] sm:$0xff]
        %v421 = vld [vmem:[%s2 + $0x20] sm:$0xff]
        %v422 = vld [vmem:[%s2 + $0x28] sm:$0xff]
        %v423 = vld [vmem:[%s2 + $0x30] sm:$0xff]
        %v424 = vld [vmem:[%s2 + $0x38] sm:$0xff]
        %v425 = vld [vmem:[%s3] sm:$0xff]
        %v426 = vld [vmem:[%s3 + $0x8] sm:$0xff]
        %v427 = vld [vmem:[%s3 + $0x10] sm:$0xff]
        %v428 = vld [vmem:[%s3 + $0x18] sm:$0xff]
        %v429 = vld [vmem:[%s3 + $0x20] sm:$0xff]
        %v430 = vld [vmem:[%s3 + $0x28] sm:$0xff]
        %v431 = vld [vmem:[%s3 + $0x30] sm:$0xff]
        %v432 = vld [vmem:[%s3 + $0x38] sm:$0xff]
        %434 = vset.pattern.permute.xlu0 0
        %435 = vperm.xlu0 %434, %v425
        %v436 = vpop.permute.xlu0 %435
        %439 = vset.pattern.permute.xlu0 0
        %440 = vperm.xlu0 %439, %v426
        %v441 = vpop.permute.xlu0 %440
        %444 = vset.pattern.permute.xlu0 0
        %445 = vperm.xlu0 %444, %v427
        %v446 = vpop.permute.xlu0 %445
        %449 = vset.pattern.permute.xlu0 0
        %450 = vperm.xlu0 %449, %v428
        %v451 = vpop.permute.xlu0 %450
        %454 = vset.pattern.permute.xlu0 0
        %455 = vperm.xlu0 %454, %v429
        %v456 = vpop.permute.xlu0 %455
        %459 = vset.pattern.permute.xlu0 0
        %460 = vperm.xlu0 %459, %v430
        %v461 = vpop.permute.xlu0 %460
        %464 = vset.pattern.permute.xlu0 0
        %465 = vperm.xlu0 %464, %v431
        %v466 = vpop.permute.xlu0 %465
        %469 = vset.pattern.permute.xlu0 0
        %470 = vperm.xlu0 %469, %v432
        %v471 = vpop.permute.xlu0 %470
        %vm473 = vcmask 261120
        %v475 = vsel %vm473, %v417, 0
        %v478 = vsel %vm473, %v418, 0
        %v481 = vsel %vm473, %v419, 0
        %v484 = vsel %vm473, %v420, 0
        %v487 = vsel %vm473, %v421, 0
        %v490 = vsel %vm473, %v422, 0
        %v493 = vsel %vm473, %v423, 0
        %v496 = vsel %vm473, %v424, 0
        %498 = vmatprep.subr.mxu0 0.0
        %499 = vmatpush1.msra.mxu0 %v413
        %500 = vmatprep.subr.mxu0 0.0
        %501 = vmatpush1.msra.mxu0 %v414
        %502 = vmatprep.subr.mxu0 0.0
        %503 = vmatpush1.msra.mxu0 %v415
        %504 = vmatprep.subr.mxu0 0.0
        %505 = vmatpush1.msra.mxu0 %v416
        %506 = vmatprep.subr.mxu0 0.0
        %507 = vmatpush1.msra.mxu0 0.0
        %508 = vmatprep.subr.mxu0 0.0
        %509 = vmatpush1.msra.mxu0 0.0
        %510 = vmatprep.subr.mxu0 0.0
        %511 = vmatpush1.msra.mxu0 0.0
        %512 = vmatprep.subr.mxu0 0.0
        %513 = vmatpush1.msra.mxu0 0.0
        %514 = vmatprep.subr.mxu0 0.0
        %515 = vmatpush1.msra.mxu0 0.0
        %516 = vmatprep.subr.mxu0 0.0
        %517 = vmatpush1.msra.mxu0 0.0
        %518 = vmatprep.subr.mxu0 0.0
        %519 = vmatpush1.msra.mxu0 0.0
        %520 = vmatprep.subr.mxu0 0.0
        %521 = vmatpush1.msra.mxu0 0.0
        %522 = vmatprep.subr.mxu0 0.0
        %523 = vmatpush1.msra.mxu0 0.0
        %524 = vmatprep.subr.mxu0 0.0
        %525 = vmatpush1.msra.mxu0 0.0
        %526 = vmatprep.subr.mxu0 0.0
        %527 = vmatpush1.msra.mxu0 0.0
        %528 = vmatprep.subr.mxu0 0.0
        %529 = vmatpush1.msra.mxu0 0.0
        %530 = vmatprep.subr.mxu0 0.0
        %531 = vmatpush1.msra.mxu0 0.0
        %532 = vmatprep.subr.mxu0 0.0
        %533 = vmatpush1.msra.mxu0 0.0
        %534 = vmatprep.subr.mxu0 0.0
        %535 = vmatpush1.msra.mxu0 0.0
        %536 = vmatprep.subr.mxu0 0.0
        %537 = vmatpush1.msra.mxu0 0.0
        %538 = vmatprep.subr.mxu0 0.0
        %539 = vmatpush1.msra.mxu0 0.0
        %540 = vmatprep.subr.mxu0 0.0
        %541 = vmatpush1.msra.mxu0 0.0
        %542 = vmatprep.subr.mxu0 0.0
        %543 = vmatpush1.msra.mxu0 0.0
        %544 = vmatprep.subr.mxu0 0.0
        %545 = vmatpush1.msra.mxu0 0.0
        %546 = vmatprep.subr.mxu0 0.0
        %547 = vmatpush1.msra.mxu0 0.0
        %548 = vmatprep.subr.mxu0 0.0
        %549 = vmatpush1.msra.mxu0 0.0
        %550 = vmatprep.subr.mxu0 0.0
        %551 = vmatpush1.msra.mxu0 0.0
        %552 = vmatprep.subr.mxu0 0.0
        %553 = vmatpush1.msra.mxu0 0.0
        %554 = vmatprep.subr.mxu0 0.0
        %555 = vmatpush1.msra.mxu0 0.0
        %556 = vmatprep.subr.mxu0 0.0
        %557 = vmatpush1.msra.mxu0 0.0
        %558 = vmatprep.subr.mxu0 0.0
        %559 = vmatpush1.msra.mxu0 0.0
        %560 = vmatprep.subr.mxu0 0.0
        %561 = vmatpush1.msra.mxu0 0.0
        %562 = vmatprep.mubr.f32.mxu0 0.0
        %563 = vmatmul.mubr.f32.gmra.mrb[0].mxu0 %v475
        %v564 = vpop.f32.mrb[0].mxu0
        %v565 = vadd.f32 %v436, %v564
        %v566 = vpop.f32.mrb[0].mxu0
        %567 = vmatprep.mubr.f32.mxu0 0.0
        %568 = vmatmul.mubr.f32.gmra.mrb[0].mxu0 %v478
        %v569 = vpop.f32.mrb[0].mxu0
        %v570 = vadd.f32 %v441, %v569
        %v571 = vpop.f32.mrb[0].mxu0
        %572 = vmatprep.mubr.f32.mxu0 0.0
        %573 = vmatmul.mubr.f32.gmra.mrb[0].mxu0 %v481
        %v574 = vpop.f32.mrb[0].mxu0
        %v575 = vadd.f32 %v446, %v574
        %v576 = vpop.f32.mrb[0].mxu0
        %577 = vmatprep.mubr.f32.mxu0 0.0
        %578 = vmatmul.mubr.f32.gmra.mrb[0].mxu0 %v484
        %v579 = vpop.f32.mrb[0].mxu0
        %v580 = vadd.f32 %v451, %v579
        %v581 = vpop.f32.mrb[0].mxu0
        %582 = vmatprep.mubr.f32.mxu0 0.0
        %583 = vmatmul.mubr.f32.gmra.mrb[0].mxu0 %v487
        %v584 = vpop.f32.mrb[0].mxu0
        %v585 = vadd.f32 %v456, %v584
        %v586 = vpop.f32.mrb[0].mxu0
        %587 = vmatprep.mubr.f32.mxu0 0.0
        %588 = vmatmul.mubr.f32.gmra.mrb[0].mxu0 %v490
        %v589 = vpop.f32.mrb[0].mxu0
        %v590 = vadd.f32 %v461, %v589
        %v591 = vpop.f32.mrb[0].mxu0
        %592 = vmatprep.mubr.f32.mxu0 0.0
        %593 = vmatmul.mubr.f32.gmra.mrb[0].mxu0 %v493
        %v594 = vpop.f32.mrb[0].mxu0
        %v595 = vadd.f32 %v466, %v594
        %v596 = vpop.f32.mrb[0].mxu0
        %597 = vmatprep.mubr.f32.mxu0 0.0
        %598 = vmatmul.mubr.f32.gmra.mrb[0].mxu0 %v496
        %v599 = vpop.f32.mrb[0].mxu0
        %v600 = vadd.f32 %v471, %v599
        %v601 = vpop.f32.mrb[0].mxu0
        %602 = vdwg.mxu0
        %v603 = vld [vmem:[%s4] sm:$0xff]
        %v604 = vld [vmem:[%s4 + $0x8] sm:$0xff]
        %v605 = vld [vmem:[%s4 + $0x10] sm:$0xff]
        %v606 = vld [vmem:[%s4 + $0x18] sm:$0xff]
        %v607 = vld [vmem:[%s4 + $0x20] sm:$0xff]
        %v608 = vld [vmem:[%s4 + $0x28] sm:$0xff]
        %v609 = vld [vmem:[%s4 + $0x30] sm:$0xff]
        %v610 = vld [vmem:[%s4 + $0x38] sm:$0xff]
        %v611 = vld [vmem:[%s5] sm:$0xff]
        %v612 = vld [vmem:[%s5 + $0x8] sm:$0xff]
        %v613 = vld [vmem:[%s5 + $0x10] sm:$0xff]
        %v614 = vld [vmem:[%s5 + $0x18] sm:$0xff]
        %v615 = vld [vmem:[%s5 + $0x20] sm:$0xff]
        %v616 = vld [vmem:[%s5 + $0x28] sm:$0xff]
        %v617 = vld [vmem:[%s5 + $0x30] sm:$0xff]
        %v618 = vld [vmem:[%s5 + $0x38] sm:$0xff]
        %620 = vset.pattern.permute.xlu0 0
        %621 = vperm.xlu0 %620, %v611
        %v622 = vpop.permute.xlu0 %621
        %625 = vset.pattern.permute.xlu0 0
        %626 = vperm.xlu0 %625, %v612
        %v627 = vpop.permute.xlu0 %626
        %630 = vset.pattern.permute.xlu0 0
        %631 = vperm.xlu0 %630, %v613
        %v632 = vpop.permute.xlu0 %631
        %635 = vset.pattern.permute.xlu0 0
        %636 = vperm.xlu0 %635, %v614
        %v637 = vpop.permute.xlu0 %636
        %640 = vset.pattern.permute.xlu0 0
        %641 = vperm.xlu0 %640, %v615
        %v642 = vpop.permute.xlu0 %641
        %645 = vset.pattern.permute.xlu0 0
        %646 = vperm.xlu0 %645, %v616
        %v647 = vpop.permute.xlu0 %646
        %650 = vset.pattern.permute.xlu0 0
        %651 = vperm.xlu0 %650, %v617
        %v652 = vpop.permute.xlu0 %651
        %655 = vset.pattern.permute.xlu0 0
        %656 = vperm.xlu0 %655, %v618
        %v657 = vpop.permute.xlu0 %656
        %vm659 = vcmask 523264
        %v661 = vsel %vm659, %v603, 0
        %v664 = vsel %vm659, %v604, 0
        %v667 = vsel %vm659, %v605, 0
        %v670 = vsel %vm659, %v606, 0
        %v673 = vsel %vm659, %v607, 0
        %v676 = vsel %vm659, %v608, 0
        %v679 = vsel %vm659, %v609, 0
        %v682 = vsel %vm659, %v610, 0
        %684 = vmatprep.subr.mxu0 0.0
        %685 = vmatpush1.msra.mxu0 %v565
        %686 = vmatprep.subr.mxu0 0.0
        %687 = vmatpush1.msra.mxu0 %v570
        %688 = vmatprep.subr.mxu0 0.0
        %689 = vmatpush1.msra.mxu0 %v575
        %690 = vmatprep.subr.mxu0 0.0
        %691 = vmatpush1.msra.mxu0 %v580
        %692 = vmatprep.subr.mxu0 0.0
        %693 = vmatpush1.msra.mxu0 %v585
        %694 = vmatprep.subr.mxu0 0.0
        %695 = vmatpush1.msra.mxu0 %v590
        %696 = vmatprep.subr.mxu0 0.0
        %697 = vmatpush1.msra.mxu0 %v595
        %698 = vmatprep.subr.mxu0 0.0
        %699 = vmatpush1.msra.mxu0 %v600
        %700 = vmatprep.subr.mxu0 0.0
        %701 = vmatpush1.msra.mxu0 0.0
        %702 = vmatprep.subr.mxu0 0.0
        %703 = vmatpush1.msra.mxu0 0.0
        %704 = vmatprep.subr.mxu0 0.0
        %705 = vmatpush1.msra.mxu0 0.0
        %706 = vmatprep.subr.mxu0 0.0
        %707 = vmatpush1.msra.mxu0 0.0
        %708 = vmatprep.subr.mxu0 0.0
        %709 = vmatpush1.msra.mxu0 0.0
        %710 = vmatprep.subr.mxu0 0.0
        %711 = vmatpush1.msra.mxu0 0.0
        %712 = vmatprep.subr.mxu0 0.0
        %713 = vmatpush1.msra.mxu0 0.0
        %714 = vmatprep.subr.mxu0 0.0
        %715 = vmatpush1.msra.mxu0 0.0
        %716 = vmatprep.subr.mxu0 0.0
        %717 = vmatpush1.msra.mxu0 0.0
        %718 = vmatprep.subr.mxu0 0.0
        %719 = vmatpush1.msra.mxu0 0.0
        %720 = vmatprep.subr.mxu0 0.0
        %721 = vmatpush1.msra.mxu0 0.0
        %722 = vmatprep.subr.mxu0 0.0
        %723 = vmatpush1.msra.mxu0 0.0
        %724 = vmatprep.subr.mxu0 0.0
        %725 = vmatpush1.msra.mxu0 0.0
        %726 = vmatprep.subr.mxu0 0.0
        %727 = vmatpush1.msra.mxu0 0.0
        %728 = vmatprep.subr.mxu0 0.0
        %729 = vmatpush1.msra.mxu0 0.0
        %730 = vmatprep.subr.mxu0 0.0
        %731 = vmatpush1.msra.mxu0 0.0
        %732 = vmatprep.subr.mxu0 0.0
        %733 = vmatpush1.msra.mxu0 0.0
        %734 = vmatprep.subr.mxu0 0.0
        %735 = vmatpush1.msra.mxu0 0.0
        %736 = vmatprep.subr.mxu0 0.0
        %737 = vmatpush1.msra.mxu0 0.0
        %738 = vmatprep.subr.mxu0 0.0
        %739 = vmatpush1.msra.mxu0 0.0
        %740 = vmatprep.subr.mxu0 0.0
        %741 = vmatpush1.msra.mxu0 0.0
        %742 = vmatprep.subr.mxu0 0.0
        %743 = vmatpush1.msra.mxu0 0.0
        %744 = vmatprep.subr.mxu0 0.0
        %745 = vmatpush1.msra.mxu0 0.0
        %746 = vmatprep.subr.mxu0 0.0
        %747 = vmatpush1.msra.mxu0 0.0
        %748 = vmatprep.mubr.f32.mxu0 0.0
        %749 = vmatmul.mubr.f32.gmra.mrb[0].mxu0 %v661
        %v750 = vpop.f32.mrb[0].mxu0
        %v751 = vadd.f32 %v622, %v750
        %v752 = vpop.f32.mrb[0].mxu0
        %753 = vmatprep.mubr.f32.mxu0 0.0
        %754 = vmatmul.mubr.f32.gmra.mrb[0].mxu0 %v664
        %v755 = vpop.f32.mrb[0].mxu0
        %v756 = vadd.f32 %v627, %v755
        %v757 = vpop.f32.mrb[0].mxu0
        %758 = vmatprep.mubr.f32.mxu0 0.0
        %759 = vmatmul.mubr.f32.gmra.mrb[0].mxu0 %v667
        %v760 = vpop.f32.mrb[0].mxu0
        %v761 = vadd.f32 %v632, %v760
        %v762 = vpop.f32.mrb[0].mxu0
        %763 = vmatprep.mubr.f32.mxu0 0.0
        %764 = vmatmul.mubr.f32.gmra.mrb[0].mxu0 %v670
        %v765 = vpop.f32.mrb[0].mxu0
        %v766 = vadd.f32 %v637, %v765
        %v767 = vpop.f32.mrb[0].mxu0
        %768 = vmatprep.mubr.f32.mxu0 0.0
        %769 = vmatmul.mubr.f32.gmra.mrb[0].mxu0 %v673
        %v770 = vpop.f32.mrb[0].mxu0
        %v771 = vadd.f32 %v642, %v770
        %v772 = vpop.f32.mrb[0].mxu0
        %773 = vmatprep.mubr.f32.mxu0 0.0
        %774 = vmatmul.mubr.f32.gmra.mrb[0].mxu0 %v676
        %v775 = vpop.f32.mrb[0].mxu0
        %v776 = vadd.f32 %v647, %v775
        %v777 = vpop.f32.mrb[0].mxu0
        %778 = vmatprep.mubr.f32.mxu0 0.0
        %779 = vmatmul.mubr.f32.gmra.mrb[0].mxu0 %v679
        %v780 = vpop.f32.mrb[0].mxu0
        %v781 = vadd.f32 %v652, %v780
        %v782 = vpop.f32.mrb[0].mxu0
        %783 = vmatprep.mubr.f32.mxu0 0.0
        %784 = vmatmul.mubr.f32.gmra.mrb[0].mxu0 %v682
        %v785 = vpop.f32.mrb[0].mxu0
        %v786 = vadd.f32 %v657, %v785
        %v787 = vpop.f32.mrb[0].mxu0
        %788 = vdwg.mxu0
        %v789 = vld [vmem:[%s6] sm:$0xff]
        %v790 = vld [vmem:[%s6 + $0x8] sm:$0xff]
        %v791 = vld [vmem:[%s6 + $0x10] sm:$0xff]
        %v792 = vld [vmem:[%s6 + $0x18] sm:$0xff]
        %v793 = vld [vmem:[%s6 + $0x20] sm:$0xff]
        %v794 = vld [vmem:[%s6 + $0x28] sm:$0xff]
        %v795 = vld [vmem:[%s6 + $0x30] sm:$0xff]
        %v796 = vld [vmem:[%s6 + $0x38] sm:$0xff]
        %v797 = vld [vmem:[%s7] sm:$0xff]
        %v798 = vld [vmem:[%s7 + $0x8] sm:$0xff]
        %v799 = vld [vmem:[%s7 + $0x10] sm:$0xff]
        %v800 = vld [vmem:[%s7 + $0x18] sm:$0xff]
        %v801 = vld [vmem:[%s7 + $0x20] sm:$0xff]
        %v802 = vld [vmem:[%s7 + $0x28] sm:$0xff]
        %v803 = vld [vmem:[%s7 + $0x30] sm:$0xff]
        %v804 = vld [vmem:[%s7 + $0x38] sm:$0xff]
        %806 = vset.pattern.permute.xlu0 0
        %807 = vperm.xlu0 %806, %v797
        %v808 = vpop.permute.xlu0 %807
        %811 = vset.pattern.permute.xlu0 0
        %812 = vperm.xlu0 %811, %v798
        %v813 = vpop.permute.xlu0 %812
        %816 = vset.pattern.permute.xlu0 0
        %817 = vperm.xlu0 %816, %v799
        %v818 = vpop.permute.xlu0 %817
        %821 = vset.pattern.permute.xlu0 0
        %822 = vperm.xlu0 %821, %v800
        %v823 = vpop.permute.xlu0 %822
        %826 = vset.pattern.permute.xlu0 0
        %827 = vperm.xlu0 %826, %v801
        %v828 = vpop.permute.xlu0 %827
        %831 = vset.pattern.permute.xlu0 0
        %832 = vperm.xlu0 %831, %v802
        %v833 = vpop.permute.xlu0 %832
        %836 = vset.pattern.permute.xlu0 0
        %837 = vperm.xlu0 %836, %v803
        %v838 = vpop.permute.xlu0 %837
        %841 = vset.pattern.permute.xlu0 0
        %842 = vperm.xlu0 %841, %v804
        %v843 = vpop.permute.xlu0 %842
        %v846 = vsel %vm659, %v789, 0
        %v849 = vsel %vm659, %v790, 0
        %v852 = vsel %vm659, %v791, 0
        %v855 = vsel %vm659, %v792, 0
        %v858 = vsel %vm659, %v793, 0
        %v861 = vsel %vm659, %v794, 0
        %v864 = vsel %vm659, %v795, 0
        %v867 = vsel %vm659, %v796, 0
        %869 = vmatprep.subr.mxu0 0.0
        %870 = vmatpush1.msra.mxu0 %v565
        %871 = vmatprep.subr.mxu0 0.0
        %872 = vmatpush1.msra.mxu0 %v570
        %873 = vmatprep.subr.mxu0 0.0
        %874 = vmatpush1.msra.mxu0 %v575
        %875 = vmatprep.subr.mxu0 0.0
        %876 = vmatpush1.msra.mxu0 %v580
        %877 = vmatprep.subr.mxu0 0.0
        %878 = vmatpush1.msra.mxu0 %v585
        %879 = vmatprep.subr.mxu0 0.0
        %880 = vmatpush1.msra.mxu0 %v590
        %881 = vmatprep.subr.mxu0 0.0
        %882 = vmatpush1.msra.mxu0 %v595
        %883 = vmatprep.subr.mxu0 0.0
        %884 = vmatpush1.msra.mxu0 %v600
        %885 = vmatprep.subr.mxu0 0.0
        %886 = vmatpush1.msra.mxu0 0.0
        %887 = vmatprep.subr.mxu0 0.0
        %888 = vmatpush1.msra.mxu0 0.0
        %889 = vmatprep.subr.mxu0 0.0
        %890 = vmatpush1.msra.mxu0 0.0
        %891 = vmatprep.subr.mxu0 0.0
        %892 = vmatpush1.msra.mxu0 0.0
        %893 = vmatprep.subr.mxu0 0.0
        %894 = vmatpush1.msra.mxu0 0.0
        %895 = vmatprep.subr.mxu0 0.0
        %896 = vmatpush1.msra.mxu0 0.0
        %897 = vmatprep.subr.mxu0 0.0
        %898 = vmatpush1.msra.mxu0 0.0
        %899 = vmatprep.subr.mxu0 0.0
        %900 = vmatpush1.msra.mxu0 0.0
        %901 = vmatprep.subr.mxu0 0.0
        %902 = vmatpush1.msra.mxu0 0.0
        %903 = vmatprep.subr.mxu0 0.0
        %904 = vmatpush1.msra.mxu0 0.0
        %905 = vmatprep.subr.mxu0 0.0
        %906 = vmatpush1.msra.mxu0 0.0
        %907 = vmatprep.subr.mxu0 0.0
        %908 = vmatpush1.msra.mxu0 0.0
        %909 = vmatprep.subr.mxu0 0.0
        %910 = vmatpush1.msra.mxu0 0.0
        %911 = vmatprep.subr.mxu0 0.0
        %912 = vmatpush1.msra.mxu0 0.0
        %913 = vmatprep.subr.mxu0 0.0
        %914 = vmatpush1.msra.mxu0 0.0
        %915 = vmatprep.subr.mxu0 0.0
        %916 = vmatpush1.msra.mxu0 0.0
        %917 = vmatprep.subr.mxu0 0.0
        %918 = vmatpush1.msra.mxu0 0.0
        %919 = vmatprep.subr.mxu0 0.0
        %920 = vmatpush1.msra.mxu0 0.0
        %921 = vmatprep.subr.mxu0 0.0
        %922 = vmatpush1.msra.mxu0 0.0
        %923 = vmatprep.subr.mxu0 0.0
        %924 = vmatpush1.msra.mxu0 0.0
        %925 = vmatprep.subr.mxu0 0.0
        %926 = vmatpush1.msra.mxu0 0.0
        %927 = vmatprep.subr.mxu0 0.0
        %928 = vmatpush1.msra.mxu0 0.0
        %929 = vmatprep.subr.mxu0 0.0
        %930 = vmatpush1.msra.mxu0 0.0
        %931 = vmatprep.subr.mxu0 0.0
        %932 = vmatpush1.msra.mxu0 0.0
        %933 = vmatprep.mubr.f32.mxu0 0.0
        %934 = vmatmul.mubr.f32.gmra.mrb[0].mxu0 %v846
        %v935 = vpop.f32.mrb[0].mxu0
        %v936 = vadd.f32 %v808, %v935
        %v937 = vpop.f32.mrb[0].mxu0
        %938 = vmatprep.mubr.f32.mxu0 0.0
        %939 = vmatmul.mubr.f32.gmra.mrb[0].mxu0 %v849
        %v940 = vpop.f32.mrb[0].mxu0
        %v941 = vadd.f32 %v813, %v940
        %v942 = vpop.f32.mrb[0].mxu0
        %943 = vmatprep.mubr.f32.mxu0 0.0
        %944 = vmatmul.mubr.f32.gmra.mrb[0].mxu0 %v852
        %v945 = vpop.f32.mrb[0].mxu0
        %v946 = vadd.f32 %v818, %v945
        %v947 = vpop.f32.mrb[0].mxu0
        %948 = vmatprep.mubr.f32.mxu0 0.0
        %949 = vmatmul.mubr.f32.gmra.mrb[0].mxu0 %v855
        %v950 = vpop.f32.mrb[0].mxu0
        %v951 = vadd.f32 %v823, %v950
        %v952 = vpop.f32.mrb[0].mxu0
        %953 = vmatprep.mubr.f32.mxu0 0.0
        %954 = vmatmul.mubr.f32.gmra.mrb[0].mxu0 %v858
        %v955 = vpop.f32.mrb[0].mxu0
        %v956 = vadd.f32 %v828, %v955
        %v957 = vpop.f32.mrb[0].mxu0
        %958 = vmatprep.mubr.f32.mxu0 0.0
        %959 = vmatmul.mubr.f32.gmra.mrb[0].mxu0 %v861
        %v960 = vpop.f32.mrb[0].mxu0
        %v961 = vadd.f32 %v833, %v960
        %v962 = vpop.f32.mrb[0].mxu0
        %963 = vmatprep.mubr.f32.mxu0 0.0
        %964 = vmatmul.mubr.f32.gmra.mrb[0].mxu0 %v864
        %v965 = vpop.f32.mrb[0].mxu0
        %v966 = vadd.f32 %v838, %v965
        %v967 = vpop.f32.mrb[0].mxu0
        %968 = vmatprep.mubr.f32.mxu0 0.0
        %969 = vmatmul.mubr.f32.gmra.mrb[0].mxu0 %v867
        %v970 = vpop.f32.mrb[0].mxu0
        %v971 = vadd.f32 %v843, %v970
        %v972 = vpop.f32.mrb[0].mxu0
        %973 = vdwg.mxu0
        %974 = vadd.xlane.f32.xlu0 %v565
        %v975 = vpop.xlane.xlu0 %974
        %976 = vadd.xlane.f32.xlu0 %v570
        %v977 = vpop.xlane.xlu0 %976
        %978 = vadd.xlane.f32.xlu0 %v575
        %v979 = vpop.xlane.xlu0 %978
        %980 = vadd.xlane.f32.xlu0 %v580
        %v981 = vpop.xlane.xlu0 %980
        %982 = vadd.xlane.f32.xlu0 %v585
        %v983 = vpop.xlane.xlu0 %982
        %984 = vadd.xlane.f32.xlu0 %v590
        %v985 = vpop.xlane.xlu0 %984
        %986 = vadd.xlane.f32.xlu0 %v595
        %v987 = vpop.xlane.xlu0 %986
        %988 = vadd.xlane.f32.xlu0 %v600
        %v989 = vpop.xlane.xlu0 %988
        %v990 = vmul.f32 %v975, 0.0078125
        %v991 = vmul.f32 %v977, 0.0078125
        %v992 = vmul.f32 %v979, 0.0078125
        %v993 = vmul.f32 %v981, 0.0078125
        %v994 = vmul.f32 %v983, 0.0078125
        %v995 = vmul.f32 %v985, 0.0078125
        %v996 = vmul.f32 %v987, 0.0078125
        %v997 = vmul.f32 %v989, 0.0078125
        %998 = vadd.xlane.f32.xlu0 %v405
        %v999 = vpop.xlane.xlu0 %998
        %1000 = vadd.xlane.f32.xlu0 %v406
        %v1001 = vpop.xlane.xlu0 %1000
        %1002 = vadd.xlane.f32.xlu0 %v407
        %v1003 = vpop.xlane.xlu0 %1002
        %1004 = vadd.xlane.f32.xlu0 %v408
        %v1005 = vpop.xlane.xlu0 %1004
        %1006 = vadd.xlane.f32.xlu0 %v409
        %v1007 = vpop.xlane.xlu0 %1006
        %1008 = vadd.xlane.f32.xlu0 %v410
        %v1009 = vpop.xlane.xlu0 %1008
        %1010 = vadd.xlane.f32.xlu0 %v411
        %v1011 = vpop.xlane.xlu0 %1010
        %1012 = vadd.xlane.f32.xlu0 %v412
        %v1013 = vpop.xlane.xlu0 %1012
        %v1014 = vmul.f32 %v999, 0.0078125
        %v1015 = vmul.f32 %v1001, 0.0078125
        %v1016 = vmul.f32 %v1003, 0.0078125
        %v1017 = vmul.f32 %v1005, 0.0078125
        %v1018 = vmul.f32 %v1007, 0.0078125
        %v1019 = vmul.f32 %v1009, 0.0078125
        %v1020 = vmul.f32 %v1011, 0.0078125
        %v1021 = vmul.f32 %v1013, 0.0078125
        %v1022 = vld [vmem:[%s8] sm:$0xff]
        %v1023 = vld [vmem:[%s8 + $0x8] sm:$0xff]
        %v1024 = vld [vmem:[%s8 + $0x10] sm:$0xff]
        %v1025 = vld [vmem:[%s8 + $0x18] sm:$0xff]
        %v1026 = vld [vmem:[%s8 + $0x20] sm:$0xff]
        %v1027 = vld [vmem:[%s8 + $0x28] sm:$0xff]
        %v1028 = vld [vmem:[%s8 + $0x30] sm:$0xff]
        %v1029 = vld [vmem:[%s8 + $0x38] sm:$0xff]
        %v1030 = vld [vmem:[%s9] sm:$0xff]
        %v1031 = vld [vmem:[%s9 + $0x8] sm:$0xff]
        %v1032 = vld [vmem:[%s9 + $0x10] sm:$0xff]
        %v1033 = vld [vmem:[%s9 + $0x18] sm:$0xff]
        %v1034 = vld [vmem:[%s9 + $0x20] sm:$0xff]
        %v1035 = vld [vmem:[%s9 + $0x28] sm:$0xff]
        %v1036 = vld [vmem:[%s9 + $0x30] sm:$0xff]
        %v1037 = vld [vmem:[%s9 + $0x38] sm:$0xff]
        %v1039 = vsel %vm659, %v1030, 0
        %v1042 = vsel %vm659, %v1031, 0
        %v1045 = vsel %vm659, %v1032, 0
        %v1048 = vsel %vm659, %v1033, 0
        %v1051 = vsel %vm659, %v1034, 0
        %v1054 = vsel %vm659, %v1035, 0
        %v1057 = vsel %vm659, %v1036, 0
        %v1060 = vsel %vm659, %v1037, 0
        %1062 = vmatprep.subr.mxu0 0.0
        %1063 = vmatpush1.msra.mxu0 %v1014
        %1064 = vmatprep.subr.mxu0 0.0
        %1065 = vmatpush1.msra.mxu0 %v1015
        %1066 = vmatprep.subr.mxu0 0.0
        %1067 = vmatpush1.msra.mxu0 %v1016
        %1068 = vmatprep.subr.mxu0 0.0
        %1069 = vmatpush1.msra.mxu0 %v1017
        %1070 = vmatprep.subr.mxu0 0.0
        %1071 = vmatpush1.msra.mxu0 %v1018
        %1072 = vmatprep.subr.mxu0 0.0
        %1073 = vmatpush1.msra.mxu0 %v1019
        %1074 = vmatprep.subr.mxu0 0.0
        %1075 = vmatpush1.msra.mxu0 %v1020
        %1076 = vmatprep.subr.mxu0 0.0
        %1077 = vmatpush1.msra.mxu0 %v1021
        %1078 = vmatprep.subr.mxu0 0.0
        %1079 = vmatpush1.msra.mxu0 0.0
        %1080 = vmatprep.subr.mxu0 0.0
        %1081 = vmatpush1.msra.mxu0 0.0
        %1082 = vmatprep.subr.mxu0 0.0
        %1083 = vmatpush1.msra.mxu0 0.0
        %1084 = vmatprep.subr.mxu0 0.0
        %1085 = vmatpush1.msra.mxu0 0.0
        %1086 = vmatprep.subr.mxu0 0.0
        %1087 = vmatpush1.msra.mxu0 0.0
        %1088 = vmatprep.subr.mxu0 0.0
        %1089 = vmatpush1.msra.mxu0 0.0
        %1090 = vmatprep.subr.mxu0 0.0
        %1091 = vmatpush1.msra.mxu0 0.0
        %1092 = vmatprep.subr.mxu0 0.0
        %1093 = vmatpush1.msra.mxu0 0.0
        %1094 = vmatprep.subr.mxu0 0.0
        %1095 = vmatpush1.msra.mxu0 0.0
        %1096 = vmatprep.subr.mxu0 0.0
        %1097 = vmatpush1.msra.mxu0 0.0
        %1098 = vmatprep.subr.mxu0 0.0
        %1099 = vmatpush1.msra.mxu0 0.0
        %1100 = vmatprep.subr.mxu0 0.0
        %1101 = vmatpush1.msra.mxu0 0.0
        %1102 = vmatprep.subr.mxu0 0.0
        %1103 = vmatpush1.msra.mxu0 0.0
        %1104 = vmatprep.subr.mxu0 0.0
        %1105 = vmatpush1.msra.mxu0 0.0
        %1106 = vmatprep.subr.mxu0 0.0
        %1107 = vmatpush1.msra.mxu0 0.0
        %1108 = vmatprep.subr.mxu0 0.0
        %1109 = vmatpush1.msra.mxu0 0.0
        %1110 = vmatprep.subr.mxu0 0.0
        %1111 = vmatpush1.msra.mxu0 0.0
        %1112 = vmatprep.subr.mxu0 0.0
        %1113 = vmatpush1.msra.mxu0 0.0
        %1114 = vmatprep.subr.mxu0 0.0
        %1115 = vmatpush1.msra.mxu0 0.0
        %1116 = vmatprep.subr.mxu0 0.0
        %1117 = vmatpush1.msra.mxu0 0.0
        %1118 = vmatprep.subr.mxu0 0.0
        %1119 = vmatpush1.msra.mxu0 0.0
        %1120 = vmatprep.subr.mxu0 0.0
        %1121 = vmatpush1.msra.mxu0 0.0
        %1122 = vmatprep.subr.mxu0 0.0
        %1123 = vmatpush1.msra.mxu0 0.0
        %1124 = vmatprep.subr.mxu0 0.0
        %1125 = vmatpush1.msra.mxu0 0.0
        %1126 = vmatprep.mubr.f32.mxu0 0.0
        %1127 = vmatmul.mubr.f32.gmra.mrb[0].mxu0 %v1039
        %v1128 = vpop.f32.mrb[0].mxu0
        %v1129 = vadd.f32 0.0, %v1128
        %v1130 = vpop.f32.mrb[0].mxu0
        %1131 = vmatprep.mubr.f32.mxu0 0.0
        %1132 = vmatmul.mubr.f32.gmra.mrb[0].mxu0 %v1042
        %v1133 = vpop.f32.mrb[0].mxu0
        %v1134 = vadd.f32 0.0, %v1133
        %v1135 = vpop.f32.mrb[0].mxu0
        %1136 = vmatprep.mubr.f32.mxu0 0.0
        %1137 = vmatmul.mubr.f32.gmra.mrb[0].mxu0 %v1045
        %v1138 = vpop.f32.mrb[0].mxu0
        %v1139 = vadd.f32 0.0, %v1138
        %v1140 = vpop.f32.mrb[0].mxu0
        %1141 = vmatprep.mubr.f32.mxu0 0.0
        %1142 = vmatmul.mubr.f32.gmra.mrb[0].mxu0 %v1048
        %v1143 = vpop.f32.mrb[0].mxu0
        %v1144 = vadd.f32 0.0, %v1143
        %v1145 = vpop.f32.mrb[0].mxu0
        %1146 = vmatprep.mubr.f32.mxu0 0.0
        %1147 = vmatmul.mubr.f32.gmra.mrb[0].mxu0 %v1051
        %v1148 = vpop.f32.mrb[0].mxu0
        %v1149 = vadd.f32 0.0, %v1148
        %v1150 = vpop.f32.mrb[0].mxu0
        %1151 = vmatprep.mubr.f32.mxu0 0.0
        %1152 = vmatmul.mubr.f32.gmra.mrb[0].mxu0 %v1054
        %v1153 = vpop.f32.mrb[0].mxu0
        %v1154 = vadd.f32 0.0, %v1153
        %v1155 = vpop.f32.mrb[0].mxu0
        %1156 = vmatprep.mubr.f32.mxu0 0.0
        %1157 = vmatmul.mubr.f32.gmra.mrb[0].mxu0 %v1057
        %v1158 = vpop.f32.mrb[0].mxu0
        %v1159 = vadd.f32 0.0, %v1158
        %v1160 = vpop.f32.mrb[0].mxu0
        %1161 = vmatprep.mubr.f32.mxu0 0.0
        %1162 = vmatmul.mubr.f32.gmra.mrb[0].mxu0 %v1060
        %v1163 = vpop.f32.mrb[0].mxu0
        %v1164 = vadd.f32 0.0, %v1163
        %v1165 = vpop.f32.mrb[0].mxu0
        %1166 = vdwg.mxu0
        %v1168 = vsel %vm659, %v1022, 0
        %v1171 = vsel %vm659, %v1023, 0
        %v1174 = vsel %vm659, %v1024, 0
        %v1177 = vsel %vm659, %v1025, 0
        %v1180 = vsel %vm659, %v1026, 0
        %v1183 = vsel %vm659, %v1027, 0
        %v1186 = vsel %vm659, %v1028, 0
        %v1189 = vsel %vm659, %v1029, 0
        %1191 = vmatprep.subr.mxu0 0.0
        %1192 = vmatpush1.msra.mxu0 %v990
        %1193 = vmatprep.subr.mxu0 0.0
        %1194 = vmatpush1.msra.mxu0 %v991
        %1195 = vmatprep.subr.mxu0 0.0
        %1196 = vmatpush1.msra.mxu0 %v992
        %1197 = vmatprep.subr.mxu0 0.0
        %1198 = vmatpush1.msra.mxu0 %v993
        %1199 = vmatprep.subr.mxu0 0.0
        %1200 = vmatpush1.msra.mxu0 %v994
        %1201 = vmatprep.subr.mxu0 0.0
        %1202 = vmatpush1.msra.mxu0 %v995
        %1203 = vmatprep.subr.mxu0 0.0
        %1204 = vmatpush1.msra.mxu0 %v996
        %1205 = vmatprep.subr.mxu0 0.0
        %1206 = vmatpush1.msra.mxu0 %v997
        %1207 = vmatprep.subr.mxu0 0.0
        %1208 = vmatpush1.msra.mxu0 0.0
        %1209 = vmatprep.subr.mxu0 0.0
        %1210 = vmatpush1.msra.mxu0 0.0
        %1211 = vmatprep.subr.mxu0 0.0
        %1212 = vmatpush1.msra.mxu0 0.0
        %1213 = vmatprep.subr.mxu0 0.0
        %1214 = vmatpush1.msra.mxu0 0.0
        %1215 = vmatprep.subr.mxu0 0.0
        %1216 = vmatpush1.msra.mxu0 0.0
        %1217 = vmatprep.subr.mxu0 0.0
        %1218 = vmatpush1.msra.mxu0 0.0
        %1219 = vmatprep.subr.mxu0 0.0
        %1220 = vmatpush1.msra.mxu0 0.0
        %1221 = vmatprep.subr.mxu0 0.0
        %1222 = vmatpush1.msra.mxu0 0.0
        %1223 = vmatprep.subr.mxu0 0.0
        %1224 = vmatpush1.msra.mxu0 0.0
        %1225 = vmatprep.subr.mxu0 0.0
        %1226 = vmatpush1.msra.mxu0 0.0
        %1227 = vmatprep.subr.mxu0 0.0
        %1228 = vmatpush1.msra.mxu0 0.0
        %1229 = vmatprep.subr.mxu0 0.0
        %1230 = vmatpush1.msra.mxu0 0.0
        %1231 = vmatprep.subr.mxu0 0.0
        %1232 = vmatpush1.msra.mxu0 0.0
        %1233 = vmatprep.subr.mxu0 0.0
        %1234 = vmatpush1.msra.mxu0 0.0
        %1235 = vmatprep.subr.mxu0 0.0
        %1236 = vmatpush1.msra.mxu0 0.0
        %1237 = vmatprep.subr.mxu0 0.0
        %1238 = vmatpush1.msra.mxu0 0.0
        %1239 = vmatprep.subr.mxu0 0.0
        %1240 = vmatpush1.msra.mxu0 0.0
        %1241 = vmatprep.subr.mxu0 0.0
        %1242 = vmatpush1.msra.mxu0 0.0
        %1243 = vmatprep.subr.mxu0 0.0
        %1244 = vmatpush1.msra.mxu0 0.0
        %1245 = vmatprep.subr.mxu0 0.0
        %1246 = vmatpush1.msra.mxu0 0.0
        %1247 = vmatprep.subr.mxu0 0.0
        %1248 = vmatpush1.msra.mxu0 0.0
        %1249 = vmatprep.subr.mxu0 0.0
        %1250 = vmatpush1.msra.mxu0 0.0
        %1251 = vmatprep.subr.mxu0 0.0
        %1252 = vmatpush1.msra.mxu0 0.0
        %1253 = vmatprep.subr.mxu0 0.0
        %1254 = vmatpush1.msra.mxu0 0.0
        %1255 = vmatprep.mubr.f32.mxu0 0.0
        %1256 = vmatmul.mubr.f32.gmra.mrb[0].mxu0 %v1168
        %v1257 = vpop.f32.mrb[0].mxu0
        %v1258 = vadd.f32 %v1129, %v1257
        %v1259 = vpop.f32.mrb[0].mxu0
        %1260 = vmatprep.mubr.f32.mxu0 0.0
        %1261 = vmatmul.mubr.f32.gmra.mrb[0].mxu0 %v1171
        %v1262 = vpop.f32.mrb[0].mxu0
        %v1263 = vadd.f32 %v1134, %v1262
        %v1264 = vpop.f32.mrb[0].mxu0
        %1265 = vmatprep.mubr.f32.mxu0 0.0
        %1266 = vmatmul.mubr.f32.gmra.mrb[0].mxu0 %v1174
        %v1267 = vpop.f32.mrb[0].mxu0
        %v1268 = vadd.f32 %v1139, %v1267
        %v1269 = vpop.f32.mrb[0].mxu0
        %1270 = vmatprep.mubr.f32.mxu0 0.0
        %1271 = vmatmul.mubr.f32.gmra.mrb[0].mxu0 %v1177
        %v1272 = vpop.f32.mrb[0].mxu0
        %v1273 = vadd.f32 %v1144, %v1272
        %v1274 = vpop.f32.mrb[0].mxu0
        %1275 = vmatprep.mubr.f32.mxu0 0.0
        %1276 = vmatmul.mubr.f32.gmra.mrb[0].mxu0 %v1180
        %v1277 = vpop.f32.mrb[0].mxu0
        %v1278 = vadd.f32 %v1149, %v1277
        %v1279 = vpop.f32.mrb[0].mxu0
        %1280 = vmatprep.mubr.f32.mxu0 0.0
        %1281 = vmatmul.mubr.f32.gmra.mrb[0].mxu0 %v1183
        %v1282 = vpop.f32.mrb[0].mxu0
        %v1283 = vadd.f32 %v1154, %v1282
        %v1284 = vpop.f32.mrb[0].mxu0
        %1285 = vmatprep.mubr.f32.mxu0 0.0
        %1286 = vmatmul.mubr.f32.gmra.mrb[0].mxu0 %v1186
        %v1287 = vpop.f32.mrb[0].mxu0
        %v1288 = vadd.f32 %v1159, %v1287
        %v1289 = vpop.f32.mrb[0].mxu0
        %1290 = vmatprep.mubr.f32.mxu0 0.0
        %1291 = vmatmul.mubr.f32.gmra.mrb[0].mxu0 %v1189
        %v1292 = vpop.f32.mrb[0].mxu0
        %v1293 = vadd.f32 %v1164, %v1292
        %v1294 = vpop.f32.mrb[0].mxu0
        %1295 = vdwg.mxu0
        %v1296 = vld [vmem:[%s10] sm:$0xff]
        %v1297 = vld [vmem:[%s10 + $0x8] sm:$0xff]
        %v1298 = vld [vmem:[%s10 + $0x10] sm:$0xff]
        %v1299 = vld [vmem:[%s10 + $0x18] sm:$0xff]
        %v1300 = vld [vmem:[%s10 + $0x20] sm:$0xff]
        %v1301 = vld [vmem:[%s10 + $0x28] sm:$0xff]
        %v1302 = vld [vmem:[%s10 + $0x30] sm:$0xff]
        %v1303 = vld [vmem:[%s10 + $0x38] sm:$0xff]
        %v1304 = vadd.f32 %v1258, %v1296
        %v1305 = vadd.f32 %v1263, %v1297
        %v1306 = vadd.f32 %v1268, %v1298
        %v1307 = vadd.f32 %v1273, %v1299
        %v1308 = vadd.f32 %v1278, %v1300
        %v1309 = vadd.f32 %v1283, %v1301
        %v1310 = vadd.f32 %v1288, %v1302
        %v1311 = vadd.f32 %v1293, %v1303
        %v1312 = vsub.f32 %v405, %v1014
        %v1313 = vsub.f32 %v406, %v1015
        %v1314 = vsub.f32 %v407, %v1016
        %v1315 = vsub.f32 %v408, %v1017
        %v1316 = vsub.f32 %v409, %v1018
        %v1317 = vsub.f32 %v410, %v1019
        %v1318 = vsub.f32 %v411, %v1020
        %v1319 = vsub.f32 %v412, %v1021
        %v1320 = vmul.f32 %v1312, %v1312
        %v1321 = vmul.f32 %v1313, %v1313
        %v1322 = vmul.f32 %v1314, %v1314
        %v1323 = vmul.f32 %v1315, %v1315
        %v1324 = vmul.f32 %v1316, %v1316
        %v1325 = vmul.f32 %v1317, %v1317
        %v1326 = vmul.f32 %v1318, %v1318
        %v1327 = vmul.f32 %v1319, %v1319
        %1328 = vadd.xlane.f32.xlu0 %v1320
        %v1329 = vpop.xlane.xlu0 %1328
        %1330 = vadd.xlane.f32.xlu0 %v1321
        %v1331 = vpop.xlane.xlu0 %1330
        %1332 = vadd.xlane.f32.xlu0 %v1322
        %v1333 = vpop.xlane.xlu0 %1332
        %1334 = vadd.xlane.f32.xlu0 %v1323
        %v1335 = vpop.xlane.xlu0 %1334
        %1336 = vadd.xlane.f32.xlu0 %v1324
        %v1337 = vpop.xlane.xlu0 %1336
        %1338 = vadd.xlane.f32.xlu0 %v1325
        %v1339 = vpop.xlane.xlu0 %1338
        %1340 = vadd.xlane.f32.xlu0 %v1326
        %v1341 = vpop.xlane.xlu0 %1340
        %1342 = vadd.xlane.f32.xlu0 %v1327
        %v1343 = vpop.xlane.xlu0 %1342
        %v1344 = vmul.f32 %v1329, 0.007874016
        %v1345 = vmul.f32 %v1331, 0.007874016
        %v1346 = vmul.f32 %v1333, 0.007874016
        %v1347 = vmul.f32 %v1335, 0.007874016
        %v1348 = vmul.f32 %v1337, 0.007874016
        %v1349 = vmul.f32 %v1339, 0.007874016
        %v1350 = vmul.f32 %v1341, 0.007874016
        %v1351 = vmul.f32 %v1343, 0.007874016
        %v1352 = vadd.f32 %v1344, 1e-05
        %v1353 = vadd.f32 %v1345, 1e-05
        %v1354 = vadd.f32 %v1346, 1e-05
        %v1355 = vadd.f32 %v1347, 1e-05
        %v1356 = vadd.f32 %v1348, 1e-05
        %v1357 = vadd.f32 %v1349, 1e-05
        %v1358 = vadd.f32 %v1350, 1e-05
        %v1359 = vadd.f32 %v1351, 1e-05
        %v1360 = vrsqrt.pop %v1352
        %v1361 = vmul.f32 %v1352, %v1360
        %vm1362 = vcmp.eq.f32.partialorder %v1352, inf
        %v1363 = vsel %vm1362, %v1352, %v1361
        %vm1364 = vcmp.eq.f32.partialorder %v1352, 0.0
        %v1365 = vand.u32 %v1352, 2147483648
        %v1366 = vsel %vm1364, %v1365, %v1363
        %v1367 = vrsqrt.pop %v1353
        %v1368 = vmul.f32 %v1353, %v1367
        %vm1369 = vcmp.eq.f32.partialorder %v1353, inf
        %v1370 = vsel %vm1369, %v1353, %v1368
        %vm1371 = vcmp.eq.f32.partialorder %v1353, 0.0
        %v1372 = vand.u32 %v1353, 2147483648
        %v1373 = vsel %vm1371, %v1372, %v1370
        %v1374 = vrsqrt.pop %v1354
        %v1375 = vmul.f32 %v1354, %v1374
        %vm1376 = vcmp.eq.f32.partialorder %v1354, inf
        %v1377 = vsel %vm1376, %v1354, %v1375
        %vm1378 = vcmp.eq.f32.partialorder %v1354, 0.0
        %v1379 = vand.u32 %v1354, 2147483648
        %v1380 = vsel %vm1378, %v1379, %v1377
        %v1381 = vrsqrt.pop %v1355
        %v1382 = vmul.f32 %v1355, %v1381
        %vm1383 = vcmp.eq.f32.partialorder %v1355, inf
        %v1384 = vsel %vm1383, %v1355, %v1382
        %vm1385 = vcmp.eq.f32.partialorder %v1355, 0.0
        %v1386 = vand.u32 %v1355, 2147483648
        %v1387 = vsel %vm1385, %v1386, %v1384
        %v1388 = vrsqrt.pop %v1356
        %v1389 = vmul.f32 %v1356, %v1388
        %vm1390 = vcmp.eq.f32.partialorder %v1356, inf
        %v1391 = vsel %vm1390, %v1356, %v1389
        %vm1392 = vcmp.eq.f32.partialorder %v1356, 0.0
        %v1393 = vand.u32 %v1356, 2147483648
        %v1394 = vsel %vm1392, %v1393, %v1391
        %v1395 = vrsqrt.pop %v1357
        %v1396 = vmul.f32 %v1357, %v1395
        %vm1397 = vcmp.eq.f32.partialorder %v1357, inf
        %v1398 = vsel %vm1397, %v1357, %v1396
        %vm1399 = vcmp.eq.f32.partialorder %v1357, 0.0
        %v1400 = vand.u32 %v1357, 2147483648
        %v1401 = vsel %vm1399, %v1400, %v1398
        %v1402 = vrsqrt.pop %v1358
        %v1403 = vmul.f32 %v1358, %v1402
        %vm1404 = vcmp.eq.f32.partialorder %v1358, inf
        %v1405 = vsel %vm1404, %v1358, %v1403
        %vm1406 = vcmp.eq.f32.partialorder %v1358, 0.0
        %v1407 = vand.u32 %v1358, 2147483648
        %v1408 = vsel %vm1406, %v1407, %v1405
        %v1409 = vrsqrt.pop %v1359
        %v1410 = vmul.f32 %v1359, %v1409
        %vm1411 = vcmp.eq.f32.partialorder %v1359, inf
        %v1412 = vsel %vm1411, %v1359, %v1410
        %vm1413 = vcmp.eq.f32.partialorder %v1359, 0.0
        %v1414 = vand.u32 %v1359, 2147483648
        %v1415 = vsel %vm1413, %v1414, %v1412
        %v1416 = vsub.f32 1.0, %v1304
        %v1417 = vsub.f32 1.0, %v1305
        %v1418 = vsub.f32 1.0, %v1306
        %v1419 = vsub.f32 1.0, %v1307
        %v1420 = vsub.f32 1.0, %v1308
        %v1421 = vsub.f32 1.0, %v1309
        %v1422 = vsub.f32 1.0, %v1310
        %v1423 = vsub.f32 1.0, %v1311
        %1425 = vset.pattern.permute.xlu0 0
        %1426 = vperm.xlu0 %1425, %v1304
        %v1427 = vpop.permute.xlu0 %1426
        %1430 = vset.pattern.permute.xlu0 0
        %1431 = vperm.xlu0 %1430, %v1305
        %v1432 = vpop.permute.xlu0 %1431
        %1435 = vset.pattern.permute.xlu0 0
        %1436 = vperm.xlu0 %1435, %v1306
        %v1437 = vpop.permute.xlu0 %1436
        %1440 = vset.pattern.permute.xlu0 0
        %1441 = vperm.xlu0 %1440, %v1307
        %v1442 = vpop.permute.xlu0 %1441
        %1445 = vset.pattern.permute.xlu0 0
        %1446 = vperm.xlu0 %1445, %v1308
        %v1447 = vpop.permute.xlu0 %1446
        %1450 = vset.pattern.permute.xlu0 0
        %1451 = vperm.xlu0 %1450, %v1309
        %v1452 = vpop.permute.xlu0 %1451
        %1455 = vset.pattern.permute.xlu0 0
        %1456 = vperm.xlu0 %1455, %v1310
        %v1457 = vpop.permute.xlu0 %1456
        %1460 = vset.pattern.permute.xlu0 0
        %1461 = vperm.xlu0 %1460, %v1311
        %v1462 = vpop.permute.xlu0 %1461
        %v1464 = vmul.f32 %v751, %v1427
        %v1465 = vmul.f32 %v756, %v1432
        %v1466 = vmul.f32 %v761, %v1437
        %v1467 = vmul.f32 %v766, %v1442
        %v1468 = vmul.f32 %v771, %v1447
        %v1469 = vmul.f32 %v776, %v1452
        %v1470 = vmul.f32 %v781, %v1457
        %v1471 = vmul.f32 %v786, %v1462
        %v1472 = vmul.f32 %v1366, %v1416
        %v1473 = vmul.f32 %v1373, %v1417
        %v1474 = vmul.f32 %v1380, %v1418
        %v1475 = vmul.f32 %v1387, %v1419
        %v1476 = vmul.f32 %v1394, %v1420
        %v1477 = vmul.f32 %v1401, %v1421
        %v1478 = vmul.f32 %v1408, %v1422
        %v1479 = vmul.f32 %v1415, %v1423
        %1481 = vset.pattern.permute.xlu0 0
        %1482 = vperm.xlu0 %1481, %v1472
        %v1483 = vpop.permute.xlu0 %1482
        %1486 = vset.pattern.permute.xlu0 0
        %1487 = vperm.xlu0 %1486, %v1473
        %v1488 = vpop.permute.xlu0 %1487
        %1491 = vset.pattern.permute.xlu0 0
        %1492 = vperm.xlu0 %1491, %v1474
        %v1493 = vpop.permute.xlu0 %1492
        %1496 = vset.pattern.permute.xlu0 0
        %1497 = vperm.xlu0 %1496, %v1475
        %v1498 = vpop.permute.xlu0 %1497
        %1501 = vset.pattern.permute.xlu0 0
        %1502 = vperm.xlu0 %1501, %v1476
        %v1503 = vpop.permute.xlu0 %1502
        %1506 = vset.pattern.permute.xlu0 0
        %1507 = vperm.xlu0 %1506, %v1477
        %v1508 = vpop.permute.xlu0 %1507
        %1511 = vset.pattern.permute.xlu0 0
        %1512 = vperm.xlu0 %1511, %v1478
        %v1513 = vpop.permute.xlu0 %1512
        %1516 = vset.pattern.permute.xlu0 0
        %1517 = vperm.xlu0 %1516, %v1479
        %v1518 = vpop.permute.xlu0 %1517
        %v1520 = vadd.f32 %v1464, %v1483
        %v1521 = vadd.f32 %v1465, %v1488
        %v1522 = vadd.f32 %v1466, %v1493
        %v1523 = vadd.f32 %v1467, %v1498
        %v1524 = vadd.f32 %v1468, %v1503
        %v1525 = vadd.f32 %v1469, %v1508
        %v1526 = vadd.f32 %v1470, %v1513
        %v1527 = vadd.f32 %v1471, %v1518
        %v1528 = vmul.f32 %v936, %v1427
        %v1529 = vmul.f32 %v941, %v1432
        %v1530 = vmul.f32 %v946, %v1437
        %v1531 = vmul.f32 %v951, %v1442
        %v1532 = vmul.f32 %v956, %v1447
        %v1533 = vmul.f32 %v961, %v1452
        %v1534 = vmul.f32 %v966, %v1457
        %v1535 = vmul.f32 %v971, %v1462
        %v1536 = vmul.f32 %v1014, %v1416
        %v1537 = vmul.f32 %v1015, %v1417
        %v1538 = vmul.f32 %v1016, %v1418
        %v1539 = vmul.f32 %v1017, %v1419
        %v1540 = vmul.f32 %v1018, %v1420
        %v1541 = vmul.f32 %v1019, %v1421
        %v1542 = vmul.f32 %v1020, %v1422
        %v1543 = vmul.f32 %v1021, %v1423
        %1545 = vset.pattern.permute.xlu0 0
        %1546 = vperm.xlu0 %1545, %v1536
        %v1547 = vpop.permute.xlu0 %1546
        %1550 = vset.pattern.permute.xlu0 0
        %1551 = vperm.xlu0 %1550, %v1537
        %v1552 = vpop.permute.xlu0 %1551
        %1555 = vset.pattern.permute.xlu0 0
        %1556 = vperm.xlu0 %1555, %v1538
        %v1557 = vpop.permute.xlu0 %1556
        %1560 = vset.pattern.permute.xlu0 0
        %1561 = vperm.xlu0 %1560, %v1539
        %v1562 = vpop.permute.xlu0 %1561
        %1565 = vset.pattern.permute.xlu0 0
        %1566 = vperm.xlu0 %1565, %v1540
        %v1567 = vpop.permute.xlu0 %1566
        %1570 = vset.pattern.permute.xlu0 0
        %1571 = vperm.xlu0 %1570, %v1541
        %v1572 = vpop.permute.xlu0 %1571
        %1575 = vset.pattern.permute.xlu0 0
        %1576 = vperm.xlu0 %1575, %v1542
        %v1577 = vpop.permute.xlu0 %1576
        %1580 = vset.pattern.permute.xlu0 0
        %1581 = vperm.xlu0 %1580, %v1543
        %v1582 = vpop.permute.xlu0 %1581
        %v1584 = vadd.f32 %v1528, %v1547
        %v1585 = vadd.f32 %v1529, %v1552
        %v1586 = vadd.f32 %v1530, %v1557
        %v1587 = vadd.f32 %v1531, %v1562
        %v1588 = vadd.f32 %v1532, %v1567
        %v1589 = vadd.f32 %v1533, %v1572
        %v1590 = vadd.f32 %v1534, %v1577
        %v1591 = vadd.f32 %v1535, %v1582
        %v1592 = vrcp.pop %v1366
        %v1593 = vmul.f32 %v1312, %v1592
        %v1594 = vrcp.pop %v1373
        %v1595 = vmul.f32 %v1313, %v1594
        %v1596 = vrcp.pop %v1380
        %v1597 = vmul.f32 %v1314, %v1596
        %v1598 = vrcp.pop %v1387
        %v1599 = vmul.f32 %v1315, %v1598
        %v1600 = vrcp.pop %v1394
        %v1601 = vmul.f32 %v1316, %v1600
        %v1602 = vrcp.pop %v1401
        %v1603 = vmul.f32 %v1317, %v1602
        %v1604 = vrcp.pop %v1408
        %v1605 = vmul.f32 %v1318, %v1604
        %v1606 = vrcp.pop %v1415
        %v1607 = vmul.f32 %v1319, %v1606
        %v1608 = vadd.f32 %v1520, 1.0
        %v1609 = vadd.f32 %v1521, 1.0
        %v1610 = vadd.f32 %v1522, 1.0
        %v1611 = vadd.f32 %v1523, 1.0
        %v1612 = vadd.f32 %v1524, 1.0
        %v1613 = vadd.f32 %v1525, 1.0
        %v1614 = vadd.f32 %v1526, 1.0
        %v1615 = vadd.f32 %v1527, 1.0
        %v1616 = vmul.f32 %v1593, %v1608
        %v1617 = vmul.f32 %v1595, %v1609
        %v1618 = vmul.f32 %v1597, %v1610
        %v1619 = vmul.f32 %v1599, %v1611
        %v1620 = vmul.f32 %v1601, %v1612
        %v1621 = vmul.f32 %v1603, %v1613
        %v1622 = vmul.f32 %v1605, %v1614
        %v1623 = vmul.f32 %v1607, %v1615
        %v1624 = vadd.f32 %v1616, %v1584
        %v1625 = vadd.f32 %v1617, %v1585
        %v1626 = vadd.f32 %v1618, %v1586
        %v1627 = vadd.f32 %v1619, %v1587
        %v1628 = vadd.f32 %v1620, %v1588
        %v1629 = vadd.f32 %v1621, %v1589
        %v1630 = vadd.f32 %v1622, %v1590
        %v1631 = vadd.f32 %v1623, %v1591
        %1632 = vst [vmem:[%s394] sm:$0xff] %v1624
        %1633 = vst [vmem:[%s394 + $0x8] sm:$0xff] %v1625
        %1634 = vst [vmem:[%s394 + $0x10] sm:$0xff] %v1626
        %1635 = vst [vmem:[%s394 + $0x18] sm:$0xff] %v1627
        %1636 = vst [vmem:[%s394 + $0x20] sm:$0xff] %v1628
        %1637 = vst [vmem:[%s394 + $0x28] sm:$0xff] %v1629
        %1638 = vst [vmem:[%s394 + $0x30] sm:$0xff] %v1630
        %1639 = vst [vmem:[%s394 + $0x38] sm:$0xff] %v1631
        %s1640 = sand.u32 %s274, 1
        %s1641 = scalar_lea.sflag [#allocation3], %s1640
        %s1642 = sand.u32 %s274, 1
        %s1643 = smul.addr %s1642, 64
        %s1644 = scalar_lea.vmem [#allocation2], %s1643
        // Predicated region
        $region65: #{elain_forward.1} parent=63 // pred_check
          %p1645 = pneg %p284
        $region66: #{elain_forward.1} parent=63 // pred_check_branch
          %1647 = sbr.rel (%p1645) target = $region68
        $region67: #{elain_forward.1} parent=63 // pred_region
          %s1649 = ssub.s32 1024, 1024
          %1650 = vsyncadd %s1641, %s1649
          %s1651 = smul.addr %s25, 8
          %s1652 = smul.addr %s1651, 128
          %s1653 = scalar_lea.hbm %s11, %s1652
          %s1654 = sshll.u32 %s1644, 4
          %s1655 = int_to_ptr.vmem [resolvable:$true] %s1654
          %1660 = dma.vmem_to_hbm [thread:$0]  %s1655, 1024, %s1653, %s1641, 128, 128, 8
        $region68: #{elain_forward.1} parent=63 // pred_fallthru
          _
      $region64: #{elain_forward.1} parent=5 // pred_fallthru
        _
      %p1661 = scmp.le.s32.totalorder 2, %s20
      // Predicated region
      $region69: #{elain_forward.1} parent=5 // pred_check
        %p1662 = pneg %p1661
      $region70: #{elain_forward.1} parent=5 // pred_check_branch
        %1664 = sbr.rel (%p1662) target = $region72
      $region71: #{elain_forward.1} parent=5 // pred_region
        %s1665 = ssub.s32 %s20, 2
        // Predicated region
        $region73: #{elain_forward.1} parent=71 // pred_check
          %p1666 = pneg %p290
        $region74: #{elain_forward.1} parent=71 // pred_check_branch
          %1668 = sbr.rel (%p1666) target = $region76
        $region75: #{elain_forward.1} parent=71 // pred_region
          %s1669 = sand.u32 %s275, 1
          %s1670 = scalar_lea.sflag [#allocation3], %s1669
          %s1671 = sand.u32 %s275, 1
          %s1672 = smul.addr %s1671, 64
          %s1673 = scalar_lea.vmem [#allocation2], %s1672
          %1674 = dma.done %s1670, 1024
        $region76: #{elain_forward.1} parent=71 // pred_fallthru
          _
      $region72: #{elain_forward.1} parent=5 // pred_fallthru
        _
    $region6: #{elain_forward.1} parent=1 // loop_footer
      %s24 = sadd.s32 1, %s20
    $region7: #{elain_forward.1} parent=1 // loop_footer_branch
      %19 = sbr.rel target = $region3
    $region8: #{elain_forward.1} parent=1 // loop_exit
      _
    %1675 = vsyncpa [#allocation3], 1
    %s1676 = scalar_lea.sflag [#allocation3], 1
    %1677 = vsyncpa %s1676, 1

</llo_original>
